<compile_context>
chip_gen: v7x
topology: tpu7x:2x2x1
jax: 0.10.0
libtpu: 0.0.40
codegen_flags: <defaults>
</compile_context>

<pallas_src>
import jax
import jax.numpy as jnp
from jax.experimental import pallas as pl
from jax.experimental.pallas import tpu as pltpu


_VMEM = pl.BlockSpec(memory_space=pltpu.MemorySpace.VMEM)


# ----------------------------------------------------------------------------
# Fused kernel: conv1+bn1+relu -> conv2+bn2+relu -> biLSTM(last step) -> FC.
# Inputs (all VMEM-resident, no grid):
#   x_ref    : (T*B, Cin)    t-major rows (row r = t*B + b), channels-last
#   w1_ref   : (3*Cin, Cf)   im2col-flattened, BN-folded conv1 weights
#   w2_ref   : (3*Cf,  Cf)   same for conv2
#   wbig_ref : (Cf+3H, 8H)   rows [0:Cf]      = [W_ih_f | W_ih_b]  (cols i,f,o,g)
#                            rows [Cf:Cf+H]   = W_hh_f (lanes 0:4H, gate-reordered)
#                            rows [Cf+H:Cf+3H]= fc.weight.T (lanes 0:2)
#   bias_ref : (4, 8H)       row0=b1, row1=b2, row2=[b_f|b_b] (gate-reordered),
#                            row3=fc bias (lanes 0:2)
#   o_ref    : (B, 2)
# ----------------------------------------------------------------------------
def _make_fused_kernel(B, T, Cin, Cf, H):
    TB = T * B

    def kernel(x_ref, w1_ref, w2_ref, wbig_ref, bias_ref, o_ref):
        biases = bias_ref[...]
        b1 = biases[0:1, 0:Cf]
        b2 = biases[1:2, 0:Cf]
        bfb = biases[2:3, :]                       # (1, 8H) fwd|bwd input bias
        fcb = biases[3:4, 0:2]

        wbig = wbig_ref[...]
        wi_cat = wbig[0:Cf, :]                     # (Cf, 8H)
        whf = wbig[Cf:Cf + H, 0:4 * H]             # (H, 4H)
        fcw = wbig[Cf + H:Cf + 3 * H, 0:2]         # (2H, 2)

        def conv_bn_relu(h, w_ref, b):
            # im2col over time (t-major rows): tap t-1 / t+1 are the array
            # shifted by B rows with one zero timestep padded in, so each tap
            # is a contiguous sublane block; one MXU matmul per conv layer.
            zpad = jnp.zeros((B, h.shape[-1]), jnp.float32)
            h_m1 = jnp.concatenate([zpad, h[0:TB - B, :]], axis=0)   # x_{t-1}
            h_p1 = jnp.concatenate([h[B:TB, :], zpad], axis=0)       # x_{t+1}
            hc = jnp.concatenate([h_m1, h, h_p1], axis=-1)           # (TB, 3C)
            y = jnp.dot(hc, w_ref[...], preferred_element_type=jnp.float32)
            return jnp.maximum(y + b, 0.0)

        # Conv blocks (dropout layers are identity at inference).
        h = conv_bn_relu(x_ref[...], w1_ref, b1)   # (TB, Cf)
        h = conv_bn_relu(h, w2_ref, b2)            # (TB, Cf)

        # Fused forward+backward LSTM input projection for ALL timesteps in one
        # (TB, Cf) @ (Cf, 8H) matmul; biases folded in with a single add.
        g_all = jnp.dot(h, wi_cat, preferred_element_type=jnp.float32) + bfb

        # Gate columns are pre-permuted to [i | f | o | g]: one sigmoid over a
        # contiguous 3H slab + one tanh instead of four H-wide EUP passes.
        def gates(g, c_prev):
            s = jax.nn.sigmoid(g[:, 0:3 * H])
            gg = jnp.tanh(g[:, 3 * H:4 * H])
            c_new = s[:, H:2 * H] * c_prev + s[:, 0:H] * gg
            return s[:, 2 * H:3 * H] * jnp.tanh(c_new), c_new

        # Forward recurrence, fully unrolled (T small & static). Only h @ W_hh
        # stays on the serial critical path; t-major rows make each per-step
        # slice a contiguous B-row block.
        h_t = jnp.zeros((B, H), jnp.float32)
        c_t = jnp.zeros((B, H), jnp.float32)
        for t in range(T):
            g = g_all[t * B:(t + 1) * B, 0:4 * H] + jnp.dot(
                h_t, whf, preferred_element_type=jnp.float32)
            h_t, c_t = gates(g, c_t)

        # Backward direction: fc reads out[:, -1, :]; its backward half is the
        # reverse scan's FIRST step (input x_{T-1}, zero initial state), so the
        # h @ W_hh_b term is identically zero and only the (already computed)
        # input projection of the last timestep is needed.
        g_b = g_all[TB - B:TB, 4 * H:8 * H]
        h_b, _ = gates(g_b, jnp.zeros((B, H), jnp.float32))

        # FC head (drop_lstm identity at inference): one matmul on [fwd|bwd].
        feat = jnp.concatenate([h_t, h_b], axis=-1)        # (B, 2H)
        o_ref[...] = jnp.dot(feat, fcw,
                             preferred_element_type=jnp.float32) + fcb

    return kernel


# ----------------------------------------------------------------------------
# One-time parameter prep (hoisted out of the forward): BN folding, transposes,
# bias sums, im2col flattening, gate reordering, input packing.
# ----------------------------------------------------------------------------
def _fold_bn(conv_w, conv_b, gamma, beta, mean, var, eps=1e-5):
    # conv_w: (Cout, Cin, 3) PyTorch layout -> tap-major (3, Cin, Cout)
    scale = gamma / jnp.sqrt(var + eps)
    w_tap = jnp.transpose(conv_w * scale[:, None, None], (2, 1, 0))
    b = (conv_b - mean) * scale + beta
    return w_tap, b


def _reorder_gates(a, H):
    # PyTorch gate order [i, f, g, o] along last axis -> [i, f, o, g]
    return jnp.concatenate([a[..., 0:2 * H], a[..., 3 * H:4 * H],
                            a[..., 2 * H:3 * H]], axis=-1)


def prepare_params(p, lstm_hidden, eps=1e-5):
    H = lstm_hidden
    w1t, b1 = _fold_bn(p['conv1_w'], p['conv1_b'], p['bn1_gamma'],
                       p['bn1_beta'], p['bn1_mean'], p['bn1_var'], eps)
    w2t, b2 = _fold_bn(p['conv2_w'], p['conv2_b'], p['bn2_gamma'],
                       p['bn2_beta'], p['bn2_mean'], p['bn2_var'], eps)
    Cin, Cf = w1t.shape[1], w1t.shape[2]

    w1col = w1t.reshape(3 * Cin, Cf)
    w2col = w2t.reshape(3 * Cf, Cf)

    r = lambda a: _reorder_gates(a, H)
    wif = r(p['w_ih_f'].T)                             # (Cf, 4H)
    wib = r(p['w_ih_b'].T)                             # (Cf, 4H)
    whf = r(p['w_hh_f'].T)                             # (H, 4H)
    bf = r((p['b_ih_f'] + p['b_hh_f'])[None, :])       # (1, 4H)
    bb = r((p['b_ih_b'] + p['b_hh_b'])[None, :])       # (1, 4H)
    # W_hh_b is never needed: the last-step readout of the reverse scan starts
    # from h=0, so its hidden-to-hidden term is identically zero.

    W = 8 * H
    pad = lambda a: jnp.pad(a, ((0, 0), (0, W - a.shape[-1])))

    wi_cat = jnp.concatenate([wif, wib], axis=-1)      # (Cf, 8H)
    fcw = p['fc_w'].T                                  # (2H, 2)
    wbig = jnp.concatenate([wi_cat, pad(whf), pad(fcw)], axis=0)   # (Cf+3H, 8H)

    biases = jnp.concatenate([
        pad(b1[None, :]),
        pad(b2[None, :]),
        jnp.concatenate([bf, bb], axis=-1),
        pad(p['fc_b'][None, :]),
    ], axis=0)                                         # (4, 8H)

    prep = {'w1col': w1col, 'w2col': w2col, 'wbig': wbig, 'biases': biases}
    return jax.tree_util.tree_map(lambda a: jnp.asarray(a, jnp.float32), prep)


# ----------------------------------------------------------------------------
# Forward: a single pallas_call, whole model resident in VMEM (no grid).
# ----------------------------------------------------------------------------
@jax.jit
def conv_lstm_forward(x, prep):
    B, T, Cin = x.shape
    Cf = prep['w2col'].shape[-1]
    H = prep['wbig'].shape[-1] // 8
    x_tmaj = jnp.transpose(x, (1, 0, 2)).reshape(T * B, Cin)   # t-major rows
    kernel = _make_fused_kernel(B, T, Cin, Cf, H)
    # TODO(synk): for serving-size batches, add a batch grid axis with
    # dimension_semantics=("parallel",) and constant index_maps on the weight
    # BlockSpecs (weights stay VMEM-resident, activations stream, and v7x's
    # second TensorCore is used). At B=2 the whole model is a few KB and any
    # grid iteration is pure overhead, so a single call wins.
    return pl.pallas_call(
        kernel,
        out_shape=jax.ShapeDtypeStruct((B, 2), jnp.float32),
        in_specs=[_VMEM] * 5,
        out_specs=_VMEM,
    )(x_tmaj, prep['w1col'], prep['w2col'], prep['wbig'], prep['biases'])


# ----------------------------------------------------------------------------
# Parameter init (mirrors the PyTorch module's shapes).
# ----------------------------------------------------------------------------
def init_params(key, input_size, conv_filters, lstm_hidden):
    ks = jax.random.split(key, 24)
    u = lambda k, shape, s: jax.random.uniform(k, shape, jnp.float32, -s, s)
    H = lstm_hidden
    return {
        'conv1_w': u(ks[0], (conv_filters, input_size, 3), 0.3),
        'conv1_b': u(ks[1], (conv_filters,), 0.1),
        'bn1_gamma': 1.0 + u(ks[2], (conv_filters,), 0.1),
        'bn1_beta': u(ks[3], (conv_filters,), 0.1),
        'bn1_mean': u(ks[4], (conv_filters,), 0.1),
        'bn1_var': 1.0 + u(ks[5], (conv_filters,), 0.1),
        'conv2_w': u(ks[6], (conv_filters, conv_filters, 3), 0.2),
        'conv2_b': u(ks[7], (conv_filters,), 0.1),
        'bn2_gamma': 1.0 + u(ks[8], (conv_filters,), 0.1),
        'bn2_beta': u(ks[9], (conv_filters,), 0.1),
        'bn2_mean': u(ks[10], (conv_filters,), 0.1),
        'bn2_var': 1.0 + u(ks[11], (conv_filters,), 0.1),
        'w_ih_f': u(ks[12], (4 * H, conv_filters), 0.2),
        'w_hh_f': u(ks[13], (4 * H, H), 0.2),
        'b_ih_f': u(ks[14], (4 * H,), 0.1),
        'b_hh_f': u(ks[15], (4 * H,), 0.1),
        'w_ih_b': u(ks[16], (4 * H, conv_filters), 0.2),
        'w_hh_b': u(ks[17], (4 * H, H), 0.2),
        'b_ih_b': u(ks[18], (4 * H,), 0.1),
        'b_hh_b': u(ks[19], (4 * H,), 0.1),
        'fc_w': u(ks[20], (2, 2 * H), 0.2),
        'fc_b': u(ks[21], (2,), 0.1),
    }


# ---------------------------- pure-JAX reference -----------------------------
# Uses the straightforward formulation: full forward scan AND full reverse scan
# (no last-step shortcut), PyTorch gate order, then out[:, -1, :] -> fc.
def reference_forward(x, p, lstm_hidden):
    H = lstm_hidden
    w1, b1 = _fold_bn(p['conv1_w'], p['conv1_b'], p['bn1_gamma'],
                      p['bn1_beta'], p['bn1_mean'], p['bn1_var'])
    w2, b2 = _fold_bn(p['conv2_w'], p['conv2_b'], p['bn2_gamma'],
                      p['bn2_beta'], p['bn2_mean'], p['bn2_var'])

    def conv(x, w3, b):
        T = x.shape[1]
        xp = jnp.pad(x, ((0, 0), (1, 1), (0, 0)))
        y = sum(jnp.einsum('btc,cf->btf', xp[:, k:k + T, :], w3[k])
                for k in range(3)) + b
        return jnp.maximum(y, 0.0)

    h = conv(conv(x, w1, b1), w2, b2)
    B, T, _ = h.shape

    def cell(x_t, hc, wi, wh, b):
        hh, cc = hc
        g = x_t @ wi + hh @ wh + b
        i = jax.nn.sigmoid(g[:, :H]); f = jax.nn.sigmoid(g[:, H:2 * H])
        gg = jnp.tanh(g[:, 2 * H:3 * H]); o = jax.nn.sigmoid(g[:, 3 * H:])
        cc = f * cc + i * gg
        return o * jnp.tanh(cc), cc

    wif, whf = p['w_ih_f'].T, p['w_hh_f'].T
    bf = (p['b_ih_f'] + p['b_hh_f'])[None, :]
    wib, whb = p['w_ih_b'].T, p['w_hh_b'].T
    bb = (p['b_ih_b'] + p['b_hh_b'])[None, :]

    hc = (jnp.zeros((B, H)), jnp.zeros((B, H)))
    for t in range(T):
        hc = cell(h[:, t, :], hc, wif, whf, bf)
    h_fwd = hc[0]

    out_b = [None] * T
    hc = (jnp.zeros((B, H)), jnp.zeros((B, H)))
    for t in reversed(range(T)):
        hc = cell(h[:, t, :], hc, wib, whb, bb)
        out_b[t] = hc[0]
    h_bwd = out_b[T - 1]          # backward half of out[:, -1, :]

    feat = jnp.concatenate([h_fwd, h_bwd], axis=-1)
    return feat @ p['fc_w'].T + p['fc_b']


if __name__ == "__main__":
    # model config: input_size=4, conv_filters=16, lstm_hidden=32,
    # dropout_rate=0.1 (identity in eval), bidirectional=True
    INPUT_SIZE, CONV_FILTERS, LSTM_HIDDEN = 4, 16, 32
    B, T = 2, 8

    key = jax.random.PRNGKey(0)
    kx, kp = jax.random.split(key)
    x = jax.random.normal(kx, (B, T, INPUT_SIZE), jnp.float32)  # (batch, seq, feat)
    params = init_params(kp, INPUT_SIZE, CONV_FILTERS, LSTM_HIDDEN)

    prep = prepare_params(params, LSTM_HIDDEN)          # one-time param prep
    prep = jax.block_until_ready(prep)

    out = conv_lstm_forward(x, prep)
    out = jax.block_until_ready(out)

    ref = reference_forward(x, params, LSTM_HIDDEN)
    assert out.shape == (B, 2)
    assert jnp.allclose(out, ref, rtol=2e-3, atol=2e-3), (out, ref)
    print("KERNEL_OK")
</pallas_src>

<mosaic_0001>
module attributes {stable_mosaic.version = 11 : i64} {
  func.func @kernel(%arg0: memref<16x4xf32, #tpu.memory_space<vmem>>, %arg1: memref<12x16xf32, #tpu.memory_space<vmem>>, %arg2: memref<48x16xf32, #tpu.memory_space<vmem>>, %arg3: memref<112x256xf32, #tpu.memory_space<vmem>>, %arg4: memref<4x256xf32, #tpu.memory_space<vmem>>, %arg5: memref<2x2xf32, #tpu.memory_space<vmem>>) attributes {dimension_semantics = [], scalar_prefetch = 0 : i64, scratch_operands = 0 : i64, tpu.core_type = #tpu.core_type<tc>} {
    %c0 = arith.constant 0 : index
    %c0_0 = arith.constant 0 : index
    %0 = vector.load %arg4[%c0, %c0_0] : memref<4x256xf32, #tpu.memory_space<vmem>>, vector<4x256xf32>
    %1 = vector.extract_strided_slice %0 {offsets = [0, 0], sizes = [1, 16], strides = [1, 1]} : vector<4x256xf32> to vector<1x16xf32>
    %2 = vector.extract_strided_slice %0 {offsets = [1, 0], sizes = [1, 16], strides = [1, 1]} : vector<4x256xf32> to vector<1x16xf32>
    %3 = vector.extract_strided_slice %0 {offsets = [2, 0], sizes = [1, 256], strides = [1, 1]} : vector<4x256xf32> to vector<1x256xf32>
    %4 = vector.extract_strided_slice %0 {offsets = [3, 0], sizes = [1, 2], strides = [1, 1]} : vector<4x256xf32> to vector<1x2xf32>
    %c0_1 = arith.constant 0 : index
    %c0_2 = arith.constant 0 : index
    %5 = vector.load %arg3[%c0_1, %c0_2] : memref<112x256xf32, #tpu.memory_space<vmem>>, vector<112x256xf32>
    %6 = vector.extract_strided_slice %5 {offsets = [0, 0], sizes = [16, 256], strides = [1, 1]} : vector<112x256xf32> to vector<16x256xf32>
    %7 = vector.extract_strided_slice %5 {offsets = [16, 0], sizes = [32, 128], strides = [1, 1]} : vector<112x256xf32> to vector<32x128xf32>
    %8 = vector.extract_strided_slice %5 {offsets = [48, 0], sizes = [64, 2], strides = [1, 1]} : vector<112x256xf32> to vector<64x2xf32>
    %c0_3 = arith.constant 0 : index
    %c0_4 = arith.constant 0 : index
    %9 = vector.load %arg0[%c0_3, %c0_4] : memref<16x4xf32, #tpu.memory_space<vmem>>, vector<16x4xf32>
    %cst = arith.constant 0.000000e+00 : f32
    %10 = vector.broadcast %cst : f32 to vector<2x4xf32>
    %11 = vector.extract_strided_slice %9 {offsets = [0, 0], sizes = [14, 4], strides = [1, 1]} : vector<16x4xf32> to vector<14x4xf32>
    %12 = tpu.concatenate %10, %11 in 0 : vector<2x4xf32>, vector<14x4xf32> -> vector<16x4xf32>
    %13 = vector.extract_strided_slice %9 {offsets = [2, 0], sizes = [14, 4], strides = [1, 1]} : vector<16x4xf32> to vector<14x4xf32>
    %14 = tpu.concatenate %13, %10 in 0 : vector<14x4xf32>, vector<2x4xf32> -> vector<16x4xf32>
    %15 = tpu.concatenate %12, %9, %14 in 1 : vector<16x4xf32>, vector<16x4xf32>, vector<16x4xf32> -> vector<16x12xf32>
    %c0_5 = arith.constant 0 : index
    %c0_6 = arith.constant 0 : index
    %16 = vector.load %arg1[%c0_5, %c0_6] : memref<12x16xf32, #tpu.memory_space<vmem>>, vector<12x16xf32>
    %cst_7 = arith.constant dense<0.000000e+00> : vector<16x16xf32>
    %17 = tpu.matmul %15, %16, %cst_7 {dimension_numbers = #tpu.dot_dimension_numbers<[1], [0], [0], [1], [0, 0, 1, 1], [], []>} : vector<16x12xf32>, vector<12x16xf32>, vector<16x16xf32> -> vector<16x16xf32>
    %18 = vector.broadcast %1 : vector<1x16xf32> to vector<16x16xf32>
    %19 = arith.addf %17, %18 : vector<16x16xf32>
    %cst_8 = arith.constant 0.000000e+00 : f32
    %20 = vector.broadcast %cst_8 : f32 to vector<16x16xf32>
    %21 = arith.maximumf %19, %20 : vector<16x16xf32>
    %cst_9 = arith.constant 0.000000e+00 : f32
    %22 = vector.broadcast %cst_9 : f32 to vector<2x16xf32>
    %23 = vector.extract_strided_slice %21 {offsets = [0, 0], sizes = [14, 16], strides = [1, 1]} : vector<16x16xf32> to vector<14x16xf32>
    %24 = tpu.concatenate %22, %23 in 0 : vector<2x16xf32>, vector<14x16xf32> -> vector<16x16xf32>
    %25 = vector.extract_strided_slice %21 {offsets = [2, 0], sizes = [14, 16], strides = [1, 1]} : vector<16x16xf32> to vector<14x16xf32>
    %26 = tpu.concatenate %25, %22 in 0 : vector<14x16xf32>, vector<2x16xf32> -> vector<16x16xf32>
    %27 = tpu.concatenate %24, %21, %26 in 1 : vector<16x16xf32>, vector<16x16xf32>, vector<16x16xf32> -> vector<16x48xf32>
    %c0_10 = arith.constant 0 : index
    %c0_11 = arith.constant 0 : index
    %28 = vector.load %arg2[%c0_10, %c0_11] : memref<48x16xf32, #tpu.memory_space<vmem>>, vector<48x16xf32>
    %cst_12 = arith.constant dense<0.000000e+00> : vector<16x16xf32>
    %29 = tpu.matmul %27, %28, %cst_12 {dimension_numbers = #tpu.dot_dimension_numbers<[1], [0], [0], [1], [0, 0, 1, 1], [], []>} : vector<16x48xf32>, vector<48x16xf32>, vector<16x16xf32> -> vector<16x16xf32>
    %30 = vector.broadcast %2 : vector<1x16xf32> to vector<16x16xf32>
    %31 = arith.addf %29, %30 : vector<16x16xf32>
    %cst_13 = arith.constant 0.000000e+00 : f32
    %32 = vector.broadcast %cst_13 : f32 to vector<16x16xf32>
    %33 = arith.maximumf %31, %32 : vector<16x16xf32>
    %cst_14 = arith.constant dense<0.000000e+00> : vector<16x256xf32>
    %34 = tpu.matmul %33, %6, %cst_14 {dimension_numbers = #tpu.dot_dimension_numbers<[1], [0], [0], [1], [0, 0, 1, 1], [], []>} : vector<16x16xf32>, vector<16x256xf32>, vector<16x256xf32> -> vector<16x256xf32>
    %35 = vector.broadcast %3 : vector<1x256xf32> to vector<16x256xf32>
    %36 = arith.addf %34, %35 : vector<16x256xf32>
    %cst_15 = arith.constant 0.000000e+00 : f32
    %37 = vector.broadcast %cst_15 : f32 to vector<2x32xf32>
    %cst_16 = arith.constant 0.000000e+00 : f32
    %38 = vector.broadcast %cst_16 : f32 to vector<2x32xf32>
    %39 = vector.extract_strided_slice %36 {offsets = [0, 0], sizes = [2, 128], strides = [1, 1]} : vector<16x256xf32> to vector<2x128xf32>
    %cst_17 = arith.constant dense<0.000000e+00> : vector<2x128xf32>
    %40 = tpu.matmul %37, %7, %cst_17 {dimension_numbers = #tpu.dot_dimension_numbers<[1], [0], [0], [1], [0, 0, 1, 1], [], []>} : vector<2x32xf32>, vector<32x128xf32>, vector<2x128xf32> -> vector<2x128xf32>
    %41 = arith.addf %39, %40 : vector<2x128xf32>
    %42 = vector.extract_strided_slice %41 {offsets = [0, 0], sizes = [2, 96], strides = [1, 1]} : vector<2x128xf32> to vector<2x96xf32>
    %43 = arith.negf %42 : vector<2x96xf32>
    %44 = math.exp %43 : vector<2x96xf32>
    %cst_18 = arith.constant 1.000000e+00 : f32
    %45 = vector.broadcast %cst_18 : f32 to vector<2x96xf32>
    %46 = arith.addf %45, %44 : vector<2x96xf32>
    %47 = arith.divf %45, %46 : vector<2x96xf32>
    %48 = vector.extract_strided_slice %41 {offsets = [0, 96], sizes = [2, 32], strides = [1, 1]} : vector<2x128xf32> to vector<2x32xf32>
    %49 = math.tanh %48 : vector<2x32xf32>
    %50 = vector.extract_strided_slice %47 {offsets = [0, 32], sizes = [2, 32], strides = [1, 1]} : vector<2x96xf32> to vector<2x32xf32>
    %51 = arith.mulf %50, %38 : vector<2x32xf32>
    %52 = vector.extract_strided_slice %47 {offsets = [0, 0], sizes = [2, 32], strides = [1, 1]} : vector<2x96xf32> to vector<2x32xf32>
    %53 = arith.mulf %52, %49 : vector<2x32xf32>
    %54 = arith.addf %51, %53 : vector<2x32xf32>
    %55 = vector.extract_strided_slice %47 {offsets = [0, 64], sizes = [2, 32], strides = [1, 1]} : vector<2x96xf32> to vector<2x32xf32>
    %56 = math.tanh %54 : vector<2x32xf32>
    %57 = arith.mulf %55, %56 : vector<2x32xf32>
    %58 = vector.extract_strided_slice %36 {offsets = [2, 0], sizes = [2, 128], strides = [1, 1]} : vector<16x256xf32> to vector<2x128xf32>
    %cst_19 = arith.constant dense<0.000000e+00> : vector<2x128xf32>
    %59 = tpu.matmul %57, %7, %cst_19 {dimension_numbers = #tpu.dot_dimension_numbers<[1], [0], [0], [1], [0, 0, 1, 1], [], []>} : vector<2x32xf32>, vector<32x128xf32>, vector<2x128xf32> -> vector<2x128xf32>
    %60 = arith.addf %58, %59 : vector<2x128xf32>
    %61 = vector.extract_strided_slice %60 {offsets = [0, 0], sizes = [2, 96], strides = [1, 1]} : vector<2x128xf32> to vector<2x96xf32>
    %62 = arith.negf %61 : vector<2x96xf32>
    %63 = math.exp %62 : vector<2x96xf32>
    %cst_20 = arith.constant 1.000000e+00 : f32
    %64 = vector.broadcast %cst_20 : f32 to vector<2x96xf32>
    %65 = arith.addf %64, %63 : vector<2x96xf32>
    %66 = arith.divf %64, %65 : vector<2x96xf32>
    %67 = vector.extract_strided_slice %60 {offsets = [0, 96], sizes = [2, 32], strides = [1, 1]} : vector<2x128xf32> to vector<2x32xf32>
    %68 = math.tanh %67 : vector<2x32xf32>
    %69 = vector.extract_strided_slice %66 {offsets = [0, 32], sizes = [2, 32], strides = [1, 1]} : vector<2x96xf32> to vector<2x32xf32>
    %70 = arith.mulf %69, %54 : vector<2x32xf32>
    %71 = vector.extract_strided_slice %66 {offsets = [0, 0], sizes = [2, 32], strides = [1, 1]} : vector<2x96xf32> to vector<2x32xf32>
    %72 = arith.mulf %71, %68 : vector<2x32xf32>
    %73 = arith.addf %70, %72 : vector<2x32xf32>
    %74 = vector.extract_strided_slice %66 {offsets = [0, 64], sizes = [2, 32], strides = [1, 1]} : vector<2x96xf32> to vector<2x32xf32>
    %75 = math.tanh %73 : vector<2x32xf32>
    %76 = arith.mulf %74, %75 : vector<2x32xf32>
    %77 = vector.extract_strided_slice %36 {offsets = [4, 0], sizes = [2, 128], strides = [1, 1]} : vector<16x256xf32> to vector<2x128xf32>
    %cst_21 = arith.constant dense<0.000000e+00> : vector<2x128xf32>
    %78 = tpu.matmul %76, %7, %cst_21 {dimension_numbers = #tpu.dot_dimension_numbers<[1], [0], [0], [1], [0, 0, 1, 1], [], []>} : vector<2x32xf32>, vector<32x128xf32>, vector<2x128xf32> -> vector<2x128xf32>
    %79 = arith.addf %77, %78 : vector<2x128xf32>
    %80 = vector.extract_strided_slice %79 {offsets = [0, 0], sizes = [2, 96], strides = [1, 1]} : vector<2x128xf32> to vector<2x96xf32>
    %81 = arith.negf %80 : vector<2x96xf32>
    %82 = math.exp %81 : vector<2x96xf32>
    %cst_22 = arith.constant 1.000000e+00 : f32
    %83 = vector.broadcast %cst_22 : f32 to vector<2x96xf32>
    %84 = arith.addf %83, %82 : vector<2x96xf32>
    %85 = arith.divf %83, %84 : vector<2x96xf32>
    %86 = vector.extract_strided_slice %79 {offsets = [0, 96], sizes = [2, 32], strides = [1, 1]} : vector<2x128xf32> to vector<2x32xf32>
    %87 = math.tanh %86 : vector<2x32xf32>
    %88 = vector.extract_strided_slice %85 {offsets = [0, 32], sizes = [2, 32], strides = [1, 1]} : vector<2x96xf32> to vector<2x32xf32>
    %89 = arith.mulf %88, %73 : vector<2x32xf32>
    %90 = vector.extract_strided_slice %85 {offsets = [0, 0], sizes = [2, 32], strides = [1, 1]} : vector<2x96xf32> to vector<2x32xf32>
    %91 = arith.mulf %90, %87 : vector<2x32xf32>
    %92 = arith.addf %89, %91 : vector<2x32xf32>
    %93 = vector.extract_strided_slice %85 {offsets = [0, 64], sizes = [2, 32], strides = [1, 1]} : vector<2x96xf32> to vector<2x32xf32>
    %94 = math.tanh %92 : vector<2x32xf32>
    %95 = arith.mulf %93, %94 : vector<2x32xf32>
    %96 = vector.extract_strided_slice %36 {offsets = [6, 0], sizes = [2, 128], strides = [1, 1]} : vector<16x256xf32> to vector<2x128xf32>
    %cst_23 = arith.constant dense<0.000000e+00> : vector<2x128xf32>
    %97 = tpu.matmul %95, %7, %cst_23 {dimension_numbers = #tpu.dot_dimension_numbers<[1], [0], [0], [1], [0, 0, 1, 1], [], []>} : vector<2x32xf32>, vector<32x128xf32>, vector<2x128xf32> -> vector<2x128xf32>
    %98 = arith.addf %96, %97 : vector<2x128xf32>
    %99 = vector.extract_strided_slice %98 {offsets = [0, 0], sizes = [2, 96], strides = [1, 1]} : vector<2x128xf32> to vector<2x96xf32>
    %100 = arith.negf %99 : vector<2x96xf32>
    %101 = math.exp %100 : vector<2x96xf32>
    %cst_24 = arith.constant 1.000000e+00 : f32
    %102 = vector.broadcast %cst_24 : f32 to vector<2x96xf32>
    %103 = arith.addf %102, %101 : vector<2x96xf32>
    %104 = arith.divf %102, %103 : vector<2x96xf32>
    %105 = vector.extract_strided_slice %98 {offsets = [0, 96], sizes = [2, 32], strides = [1, 1]} : vector<2x128xf32> to vector<2x32xf32>
    %106 = math.tanh %105 : vector<2x32xf32>
    %107 = vector.extract_strided_slice %104 {offsets = [0, 32], sizes = [2, 32], strides = [1, 1]} : vector<2x96xf32> to vector<2x32xf32>
    %108 = arith.mulf %107, %92 : vector<2x32xf32>
    %109 = vector.extract_strided_slice %104 {offsets = [0, 0], sizes = [2, 32], strides = [1, 1]} : vector<2x96xf32> to vector<2x32xf32>
    %110 = arith.mulf %109, %106 : vector<2x32xf32>
    %111 = arith.addf %108, %110 : vector<2x32xf32>
    %112 = vector.extract_strided_slice %104 {offsets = [0, 64], sizes = [2, 32], strides = [1, 1]} : vector<2x96xf32> to vector<2x32xf32>
    %113 = math.tanh %111 : vector<2x32xf32>
    %114 = arith.mulf %112, %113 : vector<2x32xf32>
    %115 = vector.extract_strided_slice %36 {offsets = [8, 0], sizes = [2, 128], strides = [1, 1]} : vector<16x256xf32> to vector<2x128xf32>
    %cst_25 = arith.constant dense<0.000000e+00> : vector<2x128xf32>
    %116 = tpu.matmul %114, %7, %cst_25 {dimension_numbers = #tpu.dot_dimension_numbers<[1], [0], [0], [1], [0, 0, 1, 1], [], []>} : vector<2x32xf32>, vector<32x128xf32>, vector<2x128xf32> -> vector<2x128xf32>
    %117 = arith.addf %115, %116 : vector<2x128xf32>
    %118 = vector.extract_strided_slice %117 {offsets = [0, 0], sizes = [2, 96], strides = [1, 1]} : vector<2x128xf32> to vector<2x96xf32>
    %119 = arith.negf %118 : vector<2x96xf32>
    %120 = math.exp %119 : vector<2x96xf32>
    %cst_26 = arith.constant 1.000000e+00 : f32
    %121 = vector.broadcast %cst_26 : f32 to vector<2x96xf32>
    %122 = arith.addf %121, %120 : vector<2x96xf32>
    %123 = arith.divf %121, %122 : vector<2x96xf32>
    %124 = vector.extract_strided_slice %117 {offsets = [0, 96], sizes = [2, 32], strides = [1, 1]} : vector<2x128xf32> to vector<2x32xf32>
    %125 = math.tanh %124 : vector<2x32xf32>
    %126 = vector.extract_strided_slice %123 {offsets = [0, 32], sizes = [2, 32], strides = [1, 1]} : vector<2x96xf32> to vector<2x32xf32>
    %127 = arith.mulf %126, %111 : vector<2x32xf32>
    %128 = vector.extract_strided_slice %123 {offsets = [0, 0], sizes = [2, 32], strides = [1, 1]} : vector<2x96xf32> to vector<2x32xf32>
    %129 = arith.mulf %128, %125 : vector<2x32xf32>
    %130 = arith.addf %127, %129 : vector<2x32xf32>
    %131 = vector.extract_strided_slice %123 {offsets = [0, 64], sizes = [2, 32], strides = [1, 1]} : vector<2x96xf32> to vector<2x32xf32>
    %132 = math.tanh %130 : vector<2x32xf32>
    %133 = arith.mulf %131, %132 : vector<2x32xf32>
    %134 = vector.extract_strided_slice %36 {offsets = [10, 0], sizes = [2, 128], strides = [1, 1]} : vector<16x256xf32> to vector<2x128xf32>
    %cst_27 = arith.constant dense<0.000000e+00> : vector<2x128xf32>
    %135 = tpu.matmul %133, %7, %cst_27 {dimension_numbers = #tpu.dot_dimension_numbers<[1], [0], [0], [1], [0, 0, 1, 1], [], []>} : vector<2x32xf32>, vector<32x128xf32>, vector<2x128xf32> -> vector<2x128xf32>
    %136 = arith.addf %134, %135 : vector<2x128xf32>
    %137 = vector.extract_strided_slice %136 {offsets = [0, 0], sizes = [2, 96], strides = [1, 1]} : vector<2x128xf32> to vector<2x96xf32>
    %138 = arith.negf %137 : vector<2x96xf32>
    %139 = math.exp %138 : vector<2x96xf32>
    %cst_28 = arith.constant 1.000000e+00 : f32
    %140 = vector.broadcast %cst_28 : f32 to vector<2x96xf32>
    %141 = arith.addf %140, %139 : vector<2x96xf32>
    %142 = arith.divf %140, %141 : vector<2x96xf32>
    %143 = vector.extract_strided_slice %136 {offsets = [0, 96], sizes = [2, 32], strides = [1, 1]} : vector<2x128xf32> to vector<2x32xf32>
    %144 = math.tanh %143 : vector<2x32xf32>
    %145 = vector.extract_strided_slice %142 {offsets = [0, 32], sizes = [2, 32], strides = [1, 1]} : vector<2x96xf32> to vector<2x32xf32>
    %146 = arith.mulf %145, %130 : vector<2x32xf32>
    %147 = vector.extract_strided_slice %142 {offsets = [0, 0], sizes = [2, 32], strides = [1, 1]} : vector<2x96xf32> to vector<2x32xf32>
    %148 = arith.mulf %147, %144 : vector<2x32xf32>
    %149 = arith.addf %146, %148 : vector<2x32xf32>
    %150 = vector.extract_strided_slice %142 {offsets = [0, 64], sizes = [2, 32], strides = [1, 1]} : vector<2x96xf32> to vector<2x32xf32>
    %151 = math.tanh %149 : vector<2x32xf32>
    %152 = arith.mulf %150, %151 : vector<2x32xf32>
    %153 = vector.extract_strided_slice %36 {offsets = [12, 0], sizes = [2, 128], strides = [1, 1]} : vector<16x256xf32> to vector<2x128xf32>
    %cst_29 = arith.constant dense<0.000000e+00> : vector<2x128xf32>
    %154 = tpu.matmul %152, %7, %cst_29 {dimension_numbers = #tpu.dot_dimension_numbers<[1], [0], [0], [1], [0, 0, 1, 1], [], []>} : vector<2x32xf32>, vector<32x128xf32>, vector<2x128xf32> -> vector<2x128xf32>
    %155 = arith.addf %153, %154 : vector<2x128xf32>
    %156 = vector.extract_strided_slice %155 {offsets = [0, 0], sizes = [2, 96], strides = [1, 1]} : vector<2x128xf32> to vector<2x96xf32>
    %157 = arith.negf %156 : vector<2x96xf32>
    %158 = math.exp %157 : vector<2x96xf32>
    %cst_30 = arith.constant 1.000000e+00 : f32
    %159 = vector.broadcast %cst_30 : f32 to vector<2x96xf32>
    %160 = arith.addf %159, %158 : vector<2x96xf32>
    %161 = arith.divf %159, %160 : vector<2x96xf32>
    %162 = vector.extract_strided_slice %155 {offsets = [0, 96], sizes = [2, 32], strides = [1, 1]} : vector<2x128xf32> to vector<2x32xf32>
    %163 = math.tanh %162 : vector<2x32xf32>
    %164 = vector.extract_strided_slice %161 {offsets = [0, 32], sizes = [2, 32], strides = [1, 1]} : vector<2x96xf32> to vector<2x32xf32>
    %165 = arith.mulf %164, %149 : vector<2x32xf32>
    %166 = vector.extract_strided_slice %161 {offsets = [0, 0], sizes = [2, 32], strides = [1, 1]} : vector<2x96xf32> to vector<2x32xf32>
    %167 = arith.mulf %166, %163 : vector<2x32xf32>
    %168 = arith.addf %165, %167 : vector<2x32xf32>
    %169 = vector.extract_strided_slice %161 {offsets = [0, 64], sizes = [2, 32], strides = [1, 1]} : vector<2x96xf32> to vector<2x32xf32>
    %170 = math.tanh %168 : vector<2x32xf32>
    %171 = arith.mulf %169, %170 : vector<2x32xf32>
    %172 = vector.extract_strided_slice %36 {offsets = [14, 0], sizes = [2, 128], strides = [1, 1]} : vector<16x256xf32> to vector<2x128xf32>
    %cst_31 = arith.constant dense<0.000000e+00> : vector<2x128xf32>
    %173 = tpu.matmul %171, %7, %cst_31 {dimension_numbers = #tpu.dot_dimension_numbers<[1], [0], [0], [1], [0, 0, 1, 1], [], []>} : vector<2x32xf32>, vector<32x128xf32>, vector<2x128xf32> -> vector<2x128xf32>
    %174 = arith.addf %172, %173 : vector<2x128xf32>
    %175 = vector.extract_strided_slice %174 {offsets = [0, 0], sizes = [2, 96], strides = [1, 1]} : vector<2x128xf32> to vector<2x96xf32>
    %176 = arith.negf %175 : vector<2x96xf32>
    %177 = math.exp %176 : vector<2x96xf32>
    %cst_32 = arith.constant 1.000000e+00 : f32
    %178 = vector.broadcast %cst_32 : f32 to vector<2x96xf32>
    %179 = arith.addf %178, %177 : vector<2x96xf32>
    %180 = arith.divf %178, %179 : vector<2x96xf32>
    %181 = vector.extract_strided_slice %174 {offsets = [0, 96], sizes = [2, 32], strides = [1, 1]} : vector<2x128xf32> to vector<2x32xf32>
    %182 = math.tanh %181 : vector<2x32xf32>
    %183 = vector.extract_strided_slice %180 {offsets = [0, 32], sizes = [2, 32], strides = [1, 1]} : vector<2x96xf32> to vector<2x32xf32>
    %184 = arith.mulf %183, %168 : vector<2x32xf32>
    %185 = vector.extract_strided_slice %180 {offsets = [0, 0], sizes = [2, 32], strides = [1, 1]} : vector<2x96xf32> to vector<2x32xf32>
    %186 = arith.mulf %185, %182 : vector<2x32xf32>
    %187 = arith.addf %184, %186 : vector<2x32xf32>
    %188 = vector.extract_strided_slice %180 {offsets = [0, 64], sizes = [2, 32], strides = [1, 1]} : vector<2x96xf32> to vector<2x32xf32>
    %189 = math.tanh %187 : vector<2x32xf32>
    %190 = arith.mulf %188, %189 : vector<2x32xf32>
    %191 = vector.extract_strided_slice %36 {offsets = [14, 128], sizes = [2, 128], strides = [1, 1]} : vector<16x256xf32> to vector<2x128xf32>
    %cst_33 = arith.constant 0.000000e+00 : f32
    %192 = vector.broadcast %cst_33 : f32 to vector<2x32xf32>
    %193 = vector.extract_strided_slice %191 {offsets = [0, 0], sizes = [2, 96], strides = [1, 1]} : vector<2x128xf32> to vector<2x96xf32>
    %194 = arith.negf %193 : vector<2x96xf32>
    %195 = math.exp %194 : vector<2x96xf32>
    %cst_34 = arith.constant 1.000000e+00 : f32
    %196 = vector.broadcast %cst_34 : f32 to vector<2x96xf32>
    %197 = arith.addf %196, %195 : vector<2x96xf32>
    %198 = arith.divf %196, %197 : vector<2x96xf32>
    %199 = vector.extract_strided_slice %191 {offsets = [0, 96], sizes = [2, 32], strides = [1, 1]} : vector<2x128xf32> to vector<2x32xf32>
    %200 = math.tanh %199 : vector<2x32xf32>
    %201 = vector.extract_strided_slice %198 {offsets = [0, 32], sizes = [2, 32], strides = [1, 1]} : vector<2x96xf32> to vector<2x32xf32>
    %202 = arith.mulf %201, %192 : vector<2x32xf32>
    %203 = vector.extract_strided_slice %198 {offsets = [0, 0], sizes = [2, 32], strides = [1, 1]} : vector<2x96xf32> to vector<2x32xf32>
    %204 = arith.mulf %203, %200 : vector<2x32xf32>
    %205 = arith.addf %202, %204 : vector<2x32xf32>
    %206 = vector.extract_strided_slice %198 {offsets = [0, 64], sizes = [2, 32], strides = [1, 1]} : vector<2x96xf32> to vector<2x32xf32>
    %207 = math.tanh %205 : vector<2x32xf32>
    %208 = arith.mulf %206, %207 : vector<2x32xf32>
    %209 = tpu.concatenate %190, %208 in 1 : vector<2x32xf32>, vector<2x32xf32> -> vector<2x64xf32>
    %cst_35 = arith.constant dense<0.000000e+00> : vector<2x2xf32>
    %210 = tpu.matmul %209, %8, %cst_35 {dimension_numbers = #tpu.dot_dimension_numbers<[1], [0], [0], [1], [0, 0, 1, 1], [], []>} : vector<2x64xf32>, vector<64x2xf32>, vector<2x2xf32> -> vector<2x2xf32>
    %211 = vector.broadcast %4 : vector<1x2xf32> to vector<2x2xf32>
    %212 = arith.addf %210, %211 : vector<2x2xf32>
    %c0_36 = arith.constant 0 : index
    %c0_37 = arith.constant 0 : index
    %213 = vector.load %arg5[%c0_36, %c0_37] : memref<2x2xf32, #tpu.memory_space<vmem>>, vector<2x2xf32>
    tpu.vector_store %arg5[%c0_36, %c0_37], %212 {strides = array<i32>} : memref<2x2xf32, #tpu.memory_space<vmem>>, vector<2x2xf32>,
    return
  }
}

</mosaic_0001>

<llo_original>
// kernel: conv_lstm_forward.1
$region0: #{conv_lstm_forward.1}
  #allocation0 [shape = 'u32[]', space=smem, size = 0x4, offset = 0x4, fixed_abs, tag = 'smem constant byte address 0x4 - core index']
  #allocation1 [shape = 'u32[144,128]{1,0:T(1,128)}', space=vmem, size = 0x12000, scoped, tag = 'internal scratch']
  %s0 = inlined_call_operand.vmem [shape: f32[16,4], index: 0, kind: input, shape index: {}]
  %s1 = inlined_call_operand.vmem [shape: f32[12,16], index: 1, kind: input, shape index: {}]
  %s2 = inlined_call_operand.vmem [shape: f32[48,16], index: 2, kind: input, shape index: {}]
  %s3 = inlined_call_operand.hbm [shape: f32[112,256], index: 3, kind: input, shape index: {}]
  %s4 = inlined_call_operand.vmem [shape: f32[4,256], index: 4, kind: input, shape index: {}]
  %s5 = inlined_call_operand.hbm [shape: f32[2,2], index: 5, kind: output, shape index: {}]
  %s6 = sld [smem:[#allocation0]]
  $region34: #{conv_lstm_forward.1} parent=0
    _
  %s8 = ssub.s32 1, %s6
  %s9 = scalar_select 0, %s8, %s6
  $region1: #{conv_lstm_forward.1} parent=0
    #allocation2 [shape = 'u8[114688]{0}', space=vmem, size = 0x1c000, scoped, tag = 'input window, operand 3, single buffered']
    #allocation3 [shape = 's32[1]{0}', space=sflag, size = 0x4, scoped, tag = 'scoped memory for conv_lstm_forward.1']
    #allocation4 [shape = 's32[1]{0}', space=sflag, size = 0x4, scoped, tag = 'scoped memory for conv_lstm_forward.1']
    #allocation5 [shape = 'u8[1024]{0}', space=vmem, size = 0x400, scoped, tag = 'output window, operand 0, single buffered']
    %10 = vsyncpa [#allocation3], 0
    %11 = vsyncpa [#allocation4], 0
    // Predicated region
    $region2: #{conv_lstm_forward.1} parent=1 // pred_check
      _
    $region3: #{conv_lstm_forward.1} parent=1 // pred_check_branch
      %13 = sbr.rel (0) target = $region5
    $region4: #{conv_lstm_forward.1} parent=1 // pred_region
      _
    $region5: #{conv_lstm_forward.1} parent=1 // pred_fallthru
      _
    // Predicated region
    $region6: #{conv_lstm_forward.1} parent=1 // pred_check
      _
    $region7: #{conv_lstm_forward.1} parent=1 // pred_check_branch
      %15 = sbr.rel (0) target = $region9
    $region8: #{conv_lstm_forward.1} parent=1 // pred_region
      _
    $region9: #{conv_lstm_forward.1} parent=1 // pred_fallthru
      _
    // Predicated region
    $region10: #{conv_lstm_forward.1} parent=1 // pred_check
      _
    $region11: #{conv_lstm_forward.1} parent=1 // pred_check_branch
      %17 = sbr.rel (0) target = $region13
    $region12: #{conv_lstm_forward.1} parent=1 // pred_region
      _
    $region13: #{conv_lstm_forward.1} parent=1 // pred_fallthru
      _
    // Predicated region
    $region14: #{conv_lstm_forward.1} parent=1 // pred_check
      _
    $region15: #{conv_lstm_forward.1} parent=1 // pred_check_branch
      %19 = sbr.rel (0) target = $region17
    $region16: #{conv_lstm_forward.1} parent=1 // pred_region
      %s21 = ssub.s32 3584, 3584
      %22 = vsyncadd [#allocation3], %s21
      %s23 = sshll.u32 [#allocation2], 4
      %s24 = int_to_ptr.vmem [resolvable:$true] %s23
      %29 = dma.hbm_to_vmem [thread:$0]  %s3, 3584, %s24, [#allocation3], 256, 256, 16
    $region17: #{conv_lstm_forward.1} parent=1 // pred_fallthru
      _
    // Predicated region
    $region18: #{conv_lstm_forward.1} parent=1 // pred_check
      _
    $region19: #{conv_lstm_forward.1} parent=1 // pred_check_branch
      %31 = sbr.rel (0) target = $region21
    $region20: #{conv_lstm_forward.1} parent=1 // pred_region
      _
    $region21: #{conv_lstm_forward.1} parent=1 // pred_fallthru
      _
    // Predicated region
    $region22: #{conv_lstm_forward.1} parent=1 // pred_check
      _
    $region23: #{conv_lstm_forward.1} parent=1 // pred_check_branch
      %33 = sbr.rel (0) target = $region25
    $region24: #{conv_lstm_forward.1} parent=1 // pred_region
      %34 = dma.done [#allocation3], 3584
    $region25: #{conv_lstm_forward.1} parent=1 // pred_fallthru
      _
    %v35 = vld [vmem:[%s4] sm:$0xff]
    %v36 = vld [vmem:[#allocation2] sm:$0xff]
    %v37 = vld [vmem:[#allocation2 + $0x8] sm:$0xff]
    %v38 = vld [vmem:[#allocation2 + $0x10] sm:$0xff]
    %v39 = vld [vmem:[#allocation2 + $0x18] sm:$0xff]
    %v40 = vld [vmem:[#allocation2 + $0x20] sm:$0xff]
    %v41 = vld [vmem:[#allocation2 + $0x30] sm:$0xff]
    %v42 = vld [vmem:[#allocation2 + $0x40] sm:$0xff]
    %v43 = vld [vmem:[#allocation2 + $0x50] sm:$0xff]
    %v44 = vld [vmem:[#allocation2 + $0x60] sm:$0xff]
    %v45 = vld [vmem:[#allocation2 + $0x70] sm:$0xff]
    %v46 = vld [vmem:[#allocation2 + $0x80] sm:$0xff]
    %v47 = vld [vmem:[#allocation2 + $0x90] sm:$0xff]
    %v48 = vld [vmem:[#allocation2 + $0xa0] sm:$0xff]
    %v49 = vld [vmem:[#allocation2 + $0xb0] sm:$0xff]
    %v50 = vld [vmem:[#allocation2 + $0xc0] sm:$0xff]
    %v51 = vld [vmem:[#allocation2 + $0xd0] sm:$0xff]
    %v52 = vld [vmem:[%s0] sm:$0xff]
    %v53 = vld [vmem:[%s0 + $0x8] sm:$0xff]
    %vm56 = vcmask 1041408
    %v57 = vrot.slane %v52, 6
    %v58 = vrot.slane %v53, 6
    %v59 = vsel %vm56, %v57, %v58
    %v62 = vsel %vm56, 0.0, %v57
    %vm63 = vcmask 1045504
    %v64 = vrot.slane %v52, 2
    %v65 = vrot.slane %v53, 2
    %v66 = vsel %vm63, %v64, %v65
    %v68 = vsel %vm63, %v65, 0.0
    %69 = vrot.lane.b32.xlu0 %v52, 4
    %v70 = vpop.permute.xlu0 %69
    %71 = vrot.lane.b32.xlu0 %v53, 4
    %v72 = vpop.permute.xlu0 %71
    %76 = vrot.lane.b32.xlu0 %v66, 8
    %v77 = vpop.permute.xlu0 %76
    %78 = vrot.lane.b32.xlu0 %v68, 8
    %v79 = vpop.permute.xlu0 %78
    %vm82 = vcmask 31744
    %v83 = vsel %vm82, %v62, %v70
    %v84 = vsel %vm82, %v59, %v72
    %vm85 = vcmask 64512
    %v86 = vsel %vm85, %v83, %v77
    %v87 = vsel %vm85, %v84, %v79
    %v88 = vld [vmem:[%s1] sm:$0xff]
    %v89 = vld [vmem:[%s1 + $0x8] sm:$0xf]
    %v90 = vlaneseq
    %v91 = vshrl.u32 %v90, 7
    %v92 = vsub.s32 0, %v91
    %v93 = vrot.slane %v35, %v92
    %vm94 = vcmask 97280
    %v96 = vsel %vm94, %v86, 0
    %v99 = vsel %vm94, %v87, 0
    %vm101 = vcmask 1043456
    %v103 = vsel %vm101, %v89, 0
    %105 = vmatprep.subr.mxu0 0.0
    %106 = vmatpush1.msra.mxu0 %v88
    %107 = vmatprep.subr.mxu0 0.0
    %108 = vmatpush1.msra.mxu0 %v103
    %109 = vmatprep.subr.mxu0 0.0
    %110 = vmatpush1.msra.mxu0 0.0
    %111 = vmatprep.subr.mxu0 0.0
    %112 = vmatpush1.msra.mxu0 0.0
    %113 = vmatprep.subr.mxu0 0.0
    %114 = vmatpush1.msra.mxu0 0.0
    %115 = vmatprep.subr.mxu0 0.0
    %116 = vmatpush1.msra.mxu0 0.0
    %117 = vmatprep.subr.mxu0 0.0
    %118 = vmatpush1.msra.mxu0 0.0
    %119 = vmatprep.subr.mxu0 0.0
    %120 = vmatpush1.msra.mxu0 0.0
    %121 = vmatprep.subr.mxu0 0.0
    %122 = vmatpush1.msra.mxu0 0.0
    %123 = vmatprep.subr.mxu0 0.0
    %124 = vmatpush1.msra.mxu0 0.0
    %125 = vmatprep.subr.mxu0 0.0
    %126 = vmatpush1.msra.mxu0 0.0
    %127 = vmatprep.subr.mxu0 0.0
    %128 = vmatpush1.msra.mxu0 0.0
    %129 = vmatprep.subr.mxu0 0.0
    %130 = vmatpush1.msra.mxu0 0.0
    %131 = vmatprep.subr.mxu0 0.0
    %132 = vmatpush1.msra.mxu0 0.0
    %133 = vmatprep.subr.mxu0 0.0
    %134 = vmatpush1.msra.mxu0 0.0
    %135 = vmatprep.subr.mxu0 0.0
    %136 = vmatpush1.msra.mxu0 0.0
    %137 = vmatprep.subr.mxu0 0.0
    %138 = vmatpush1.msra.mxu0 0.0
    %139 = vmatprep.subr.mxu0 0.0
    %140 = vmatpush1.msra.mxu0 0.0
    %141 = vmatprep.subr.mxu0 0.0
    %142 = vmatpush1.msra.mxu0 0.0
    %143 = vmatprep.subr.mxu0 0.0
    %144 = vmatpush1.msra.mxu0 0.0
    %145 = vmatprep.subr.mxu0 0.0
    %146 = vmatpush1.msra.mxu0 0.0
    %147 = vmatprep.subr.mxu0 0.0
    %148 = vmatpush1.msra.mxu0 0.0
    %149 = vmatprep.subr.mxu0 0.0
    %150 = vmatpush1.msra.mxu0 0.0
    %151 = vmatprep.subr.mxu0 0.0
    %152 = vmatpush1.msra.mxu0 0.0
    %153 = vmatprep.subr.mxu0 0.0
    %154 = vmatpush1.msra.mxu0 0.0
    %155 = vmatprep.subr.mxu0 0.0
    %156 = vmatpush1.msra.mxu0 0.0
    %157 = vmatprep.subr.mxu0 0.0
    %158 = vmatpush1.msra.mxu0 0.0
    %159 = vmatprep.subr.mxu0 0.0
    %160 = vmatpush1.msra.mxu0 0.0
    %161 = vmatprep.subr.mxu0 0.0
    %162 = vmatpush1.msra.mxu0 0.0
    %163 = vmatprep.subr.mxu0 0.0
    %164 = vmatpush1.msra.mxu0 0.0
    %165 = vmatprep.subr.mxu0 0.0
    %166 = vmatpush1.msra.mxu0 0.0
    %167 = vmatprep.subr.mxu0 0.0
    %168 = vmatpush1.msra.mxu0 0.0
    %169 = vmatprep.mubr.f32.mxu0 0.0
    %170 = vmatmul.mubr.f32.gmra.mrb[0].mxu0 %v96
    %v171 = vpop.f32.mrb[0].mxu0
    %v172 = vadd.f32 %v93, %v171
    %v173 = vpop.f32.mrb[0].mxu0
    %174 = vmatprep.mubr.f32.mxu0 0.0
    %175 = vmatmul.mubr.f32.gmra.mrb[0].mxu0 %v99
    %v176 = vpop.f32.mrb[0].mxu0
    %v177 = vadd.f32 %v93, %v176
    %v178 = vpop.f32.mrb[0].mxu0
    %179 = vdwg.mxu0
    %v180 = vmax.f32 %v172, 0.0
    %v181 = vmax.f32 %v177, 0.0
    %v184 = vrot.slane %v180, 6
    %v185 = vrot.slane %v181, 6
    %v186 = vsel %vm56, %v184, %v185
    %v189 = vsel %vm56, 0.0, %v184
    %v190 = vrot.slane %v180, 2
    %v191 = vrot.slane %v181, 2
    %v192 = vsel %vm63, %v190, %v191
    %v194 = vsel %vm63, %v191, 0.0
    %195 = vrot.lane.b32.xlu0 %v180, 16
    %v196 = vpop.permute.xlu0 %195
    %197 = vrot.lane.b32.xlu0 %v181, 16
    %v198 = vpop.permute.xlu0 %197
    %202 = vrot.lane.b32.xlu0 %v192, 32
    %v203 = vpop.permute.xlu0 %202
    %204 = vrot.lane.b32.xlu0 %v194, 32
    %v205 = vpop.permute.xlu0 %204
    %vm208 = vcmask 130048
    %v209 = vsel %vm208, %v189, %v196
    %v210 = vsel %vm208, %v186, %v198
    %vm211 = vcmask 261120
    %v212 = vsel %vm211, %v209, %v203
    %v213 = vsel %vm211, %v210, %v205
    %v214 = vld [vmem:[%s2] sm:$0xff]
    %v215 = vld [vmem:[%s2 + $0x8] sm:$0xff]
    %v216 = vld [vmem:[%s2 + $0x10] sm:$0xff]
    %v217 = vld [vmem:[%s2 + $0x18] sm:$0xff]
    %v218 = vld [vmem:[%s2 + $0x20] sm:$0xff]
    %v219 = vld [vmem:[%s2 + $0x28] sm:$0xff]
    %v220 = vlaneseq
    %v221 = vshrl.u32 %v220, 7
    %v222 = vsub.s32 1, %v221
    %v223 = vrot.slane %v35, %v222
    %vm224 = vcmask 392192
    %v226 = vsel %vm224, %v212, 0
    %v229 = vsel %vm224, %v213, 0
    %231 = vmatprep.subr.mxu0 0.0
    %232 = vmatpush1.msra.mxu0 %v214
    %233 = vmatprep.subr.mxu0 0.0
    %234 = vmatpush1.msra.mxu0 %v215
    %235 = vmatprep.subr.mxu0 0.0
    %236 = vmatpush1.msra.mxu0 %v216
    %237 = vmatprep.subr.mxu0 0.0
    %238 = vmatpush1.msra.mxu0 %v217
    %239 = vmatprep.subr.mxu0 0.0
    %240 = vmatpush1.msra.mxu0 %v218
    %241 = vmatprep.subr.mxu0 0.0
    %242 = vmatpush1.msra.mxu0 %v219
    %243 = vmatprep.subr.mxu0 0.0
    %244 = vmatpush1.msra.mxu0 0.0
    %245 = vmatprep.subr.mxu0 0.0
    %246 = vmatpush1.msra.mxu0 0.0
    %247 = vmatprep.subr.mxu0 0.0
    %248 = vmatpush1.msra.mxu0 0.0
    %249 = vmatprep.subr.mxu0 0.0
    %250 = vmatpush1.msra.mxu0 0.0
    %251 = vmatprep.subr.mxu0 0.0
    %252 = vmatpush1.msra.mxu0 0.0
    %253 = vmatprep.subr.mxu0 0.0
    %254 = vmatpush1.msra.mxu0 0.0
    %255 = vmatprep.subr.mxu0 0.0
    %256 = vmatpush1.msra.mxu0 0.0
    %257 = vmatprep.subr.mxu0 0.0
    %258 = vmatpush1.msra.mxu0 0.0
    %259 = vmatprep.subr.mxu0 0.0
    %260 = vmatpush1.msra.mxu0 0.0
    %261 = vmatprep.subr.mxu0 0.0
    %262 = vmatpush1.msra.mxu0 0.0
    %263 = vmatprep.subr.mxu0 0.0
    %264 = vmatpush1.msra.mxu0 0.0
    %265 = vmatprep.subr.mxu0 0.0
    %266 = vmatpush1.msra.mxu0 0.0
    %267 = vmatprep.subr.mxu0 0.0
    %268 = vmatpush1.msra.mxu0 0.0
    %269 = vmatprep.subr.mxu0 0.0
    %270 = vmatpush1.msra.mxu0 0.0
    %271 = vmatprep.subr.mxu0 0.0
    %272 = vmatpush1.msra.mxu0 0.0
    %273 = vmatprep.subr.mxu0 0.0
    %274 = vmatpush1.msra.mxu0 0.0
    %275 = vmatprep.subr.mxu0 0.0
    %276 = vmatpush1.msra.mxu0 0.0
    %277 = vmatprep.subr.mxu0 0.0
    %278 = vmatpush1.msra.mxu0 0.0
    %279 = vmatprep.subr.mxu0 0.0
    %280 = vmatpush1.msra.mxu0 0.0
    %281 = vmatprep.subr.mxu0 0.0
    %282 = vmatpush1.msra.mxu0 0.0
    %283 = vmatprep.subr.mxu0 0.0
    %284 = vmatpush1.msra.mxu0 0.0
    %285 = vmatprep.subr.mxu0 0.0
    %286 = vmatpush1.msra.mxu0 0.0
    %287 = vmatprep.subr.mxu0 0.0
    %288 = vmatpush1.msra.mxu0 0.0
    %289 = vmatprep.subr.mxu0 0.0
    %290 = vmatpush1.msra.mxu0 0.0
    %291 = vmatprep.subr.mxu0 0.0
    %292 = vmatpush1.msra.mxu0 0.0
    %293 = vmatprep.subr.mxu0 0.0
    %294 = vmatpush1.msra.mxu0 0.0
    %295 = vmatprep.mubr.f32.mxu0 0.0
    %296 = vmatmul.mubr.f32.gmra.mrb[0].mxu0 %v226
    %v297 = vpop.f32.mrb[0].mxu0
    %v298 = vadd.f32 %v223, %v297
    %v299 = vpop.f32.mrb[0].mxu0
    %300 = vmatprep.mubr.f32.mxu0 0.0
    %301 = vmatmul.mubr.f32.gmra.mrb[0].mxu0 %v229
    %v302 = vpop.f32.mrb[0].mxu0
    %v303 = vadd.f32 %v223, %v302
    %v304 = vpop.f32.mrb[0].mxu0
    %305 = vdwg.mxu0
    %v306 = vmax.f32 %v298, 0.0
    %v307 = vmax.f32 %v303, 0.0
    %v309 = vlaneseq
    %v310 = vshrl.u32 %v309, 7
    %v311 = vsub.s32 2, %v310
    %v312 = vrot.slane %v35, %v311
    %v313 = vlaneseq
    %v314 = vshrl.u32 %v313, 7
    %v315 = vsub.s32 6, %v314
    %v316 = vrot.slane %v35, %v315
    %v319 = vlaneseq
    %v320 = vshrl.u32 %v319, 7
    %v321 = vsub.s32 2, %v320
    %v322 = vrot.slane %v312, %v321
    %v323 = vlaneseq
    %v324 = vshrl.u32 %v323, 7
    %v325 = vsub.s32 2, %v324
    %v326 = vrot.slane %v316, %v325
    %v328 = vsel %vm208, %v306, 0
    %v331 = vsel %vm208, %v307, 0
    %333 = vmatprep.subr.mxu0 %v37
    %334 = vmatpush1.msra.mxu0 %v36
    %335 = vmatprep.subr.mxu0 %v39
    %336 = vmatpush1.msra.mxu0 %v38
    %337 = vmatprep.subr.mxu0 0.0
    %338 = vmatpush1.msra.mxu0 0.0
    %339 = vmatprep.subr.mxu0 0.0
    %340 = vmatpush1.msra.mxu0 0.0
    %341 = vmatprep.subr.mxu0 0.0
    %342 = vmatpush1.msra.mxu0 0.0
    %343 = vmatprep.subr.mxu0 0.0
    %344 = vmatpush1.msra.mxu0 0.0
    %345 = vmatprep.subr.mxu0 0.0
    %346 = vmatpush1.msra.mxu0 0.0
    %347 = vmatprep.subr.mxu0 0.0
    %348 = vmatpush1.msra.mxu0 0.0
    %349 = vmatprep.subr.mxu0 0.0
    %350 = vmatpush1.msra.mxu0 0.0
    %351 = vmatprep.subr.mxu0 0.0
    %352 = vmatpush1.msra.mxu0 0.0
    %353 = vmatprep.subr.mxu0 0.0
    %354 = vmatpush1.msra.mxu0 0.0
    %355 = vmatprep.subr.mxu0 0.0
    %356 = vmatpush1.msra.mxu0 0.0
    %357 = vmatprep.subr.mxu0 0.0
    %358 = vmatpush1.msra.mxu0 0.0
    %359 = vmatprep.subr.mxu0 0.0
    %360 = vmatpush1.msra.mxu0 0.0
    %361 = vmatprep.subr.mxu0 0.0
    %362 = vmatpush1.msra.mxu0 0.0
    %363 = vmatprep.subr.mxu0 0.0
    %364 = vmatpush1.msra.mxu0 0.0
    %365 = vmatprep.subr.mxu0 0.0
    %366 = vmatpush1.msra.mxu0 0.0
    %367 = vmatprep.subr.mxu0 0.0
    %368 = vmatpush1.msra.mxu0 0.0
    %369 = vmatprep.subr.mxu0 0.0
    %370 = vmatpush1.msra.mxu0 0.0
    %371 = vmatprep.subr.mxu0 0.0
    %372 = vmatpush1.msra.mxu0 0.0
    %373 = vmatprep.subr.mxu0 0.0
    %374 = vmatpush1.msra.mxu0 0.0
    %375 = vmatprep.subr.mxu0 0.0
    %376 = vmatpush1.msra.mxu0 0.0
    %377 = vmatprep.subr.mxu0 0.0
    %378 = vmatpush1.msra.mxu0 0.0
    %379 = vmatprep.subr.mxu0 0.0
    %380 = vmatpush1.msra.mxu0 0.0
    %381 = vmatprep.subr.mxu0 0.0
    %382 = vmatpush1.msra.mxu0 0.0
    %383 = vmatprep.subr.mxu0 0.0
    %384 = vmatpush1.msra.mxu0 0.0
    %385 = vmatprep.subr.mxu0 0.0
    %386 = vmatpush1.msra.mxu0 0.0
    %387 = vmatprep.subr.mxu0 0.0
    %388 = vmatpush1.msra.mxu0 0.0
    %389 = vmatprep.subr.mxu0 0.0
    %390 = vmatpush1.msra.mxu0 0.0
    %391 = vmatprep.subr.mxu0 0.0
    %392 = vmatpush1.msra.mxu0 0.0
    %393 = vmatprep.subr.mxu0 0.0
    %394 = vmatpush1.msra.mxu0 0.0
    %395 = vmatprep.subr.mxu0 0.0
    %396 = vmatpush1.msra.mxu0 0.0
    %397 = vmatprep.mubr.f32.mxu0 0.0
    %398 = vmatmul.mubr.f32.gmra.mrb[0].mxu0 %v328
    %v399 = vpop.f32.mrb[0].mxu0
    %v400 = vadd.f32 %v322, %v399
    %v401 = vpop.f32.mrb[0].mxu0
    %402 = vmatprep.mubr.f32.mxu0 0.0
    %403 = vmatmul.mubr.f32.gmra.mrb[0].mxu0 %v331
    %v404 = vpop.f32.mrb[0].mxu0
    %v405 = vadd.f32 %v322, %v404
    %v406 = vpop.f32.mrb[0].mxu0
    %v407 = vadd.f32 %v326, %v406
    %408 = vdwg.mxu0
    %v410 = vsel %vm211, 0.0, 0
    %412 = vmatprep.subr.mxu0 0.0
    %413 = vmatpush1.msra.mxu0 %v40
    %414 = vmatprep.subr.mxu0 0.0
    %415 = vmatpush1.msra.mxu0 %v41
    %416 = vmatprep.subr.mxu0 0.0
    %417 = vmatpush1.msra.mxu0 %v42
    %418 = vmatprep.subr.mxu0 0.0
    %419 = vmatpush1.msra.mxu0 %v43
    %420 = vmatprep.subr.mxu0 0.0
    %421 = vmatpush1.msra.mxu0 0.0
    %422 = vmatprep.subr.mxu0 0.0
    %423 = vmatpush1.msra.mxu0 0.0
    %424 = vmatprep.subr.mxu0 0.0
    %425 = vmatpush1.msra.mxu0 0.0
    %426 = vmatprep.subr.mxu0 0.0
    %427 = vmatpush1.msra.mxu0 0.0
    %428 = vmatprep.subr.mxu0 0.0
    %429 = vmatpush1.msra.mxu0 0.0
    %430 = vmatprep.subr.mxu0 0.0
    %431 = vmatpush1.msra.mxu0 0.0
    %432 = vmatprep.subr.mxu0 0.0
    %433 = vmatpush1.msra.mxu0 0.0
    %434 = vmatprep.subr.mxu0 0.0
    %435 = vmatpush1.msra.mxu0 0.0
    %436 = vmatprep.subr.mxu0 0.0
    %437 = vmatpush1.msra.mxu0 0.0
    %438 = vmatprep.subr.mxu0 0.0
    %439 = vmatpush1.msra.mxu0 0.0
    %440 = vmatprep.subr.mxu0 0.0
    %441 = vmatpush1.msra.mxu0 0.0
    %442 = vmatprep.subr.mxu0 0.0
    %443 = vmatpush1.msra.mxu0 0.0
    %444 = vmatprep.subr.mxu0 0.0
    %445 = vmatpush1.msra.mxu0 0.0
    %446 = vmatprep.subr.mxu0 0.0
    %447 = vmatpush1.msra.mxu0 0.0
    %448 = vmatprep.subr.mxu0 0.0
    %449 = vmatpush1.msra.mxu0 0.0
    %450 = vmatprep.subr.mxu0 0.0
    %451 = vmatpush1.msra.mxu0 0.0
    %452 = vmatprep.subr.mxu0 0.0
    %453 = vmatpush1.msra.mxu0 0.0
    %454 = vmatprep.subr.mxu0 0.0
    %455 = vmatpush1.msra.mxu0 0.0
    %456 = vmatprep.subr.mxu0 0.0
    %457 = vmatpush1.msra.mxu0 0.0
    %458 = vmatprep.subr.mxu0 0.0
    %459 = vmatpush1.msra.mxu0 0.0
    %460 = vmatprep.subr.mxu0 0.0
    %461 = vmatpush1.msra.mxu0 0.0
    %462 = vmatprep.subr.mxu0 0.0
    %463 = vmatpush1.msra.mxu0 0.0
    %464 = vmatprep.subr.mxu0 0.0
    %465 = vmatpush1.msra.mxu0 0.0
    %466 = vmatprep.subr.mxu0 0.0
    %467 = vmatpush1.msra.mxu0 0.0
    %468 = vmatprep.subr.mxu0 0.0
    %469 = vmatpush1.msra.mxu0 0.0
    %470 = vmatprep.subr.mxu0 0.0
    %471 = vmatpush1.msra.mxu0 0.0
    %472 = vmatprep.subr.mxu0 0.0
    %473 = vmatpush1.msra.mxu0 0.0
    %474 = vmatprep.subr.mxu0 0.0
    %475 = vmatpush1.msra.mxu0 0.0
    %476 = vmatprep.mubr.f32.mxu0 0.0
    %477 = vmatmul.mubr.f32.gmra.mrb[0].mxu0 %v410
    %v478 = vpop.f32.mrb[0].mxu0
    %v479 = vadd.f32 0.0, %v478
    %v480 = vpop.f32.mrb[0].mxu0
    %481 = vdwg.mxu0
    %v482 = vadd.f32 %v400, %v479
    %v483 = vxor.u32 %v482, 2147483648
    %v484 = vmul.f32 %v483, 1.442695
    %v485 = vpow.pop %v484
    %v486 = vadd.f32 %v485, 1.0
    %v487 = vrcp.pop %v486
    %v488 = vmul.f32 1.0, %v487
    %v489 = vtanh.pop %v482
    %v490 = vmul.f32 %v488, 0.0
    %492 = vrot.lane.b32.xlu0 %v489, 32
    %v493 = vpop.permute.xlu0 %492
    %v495 = vmul.f32 %v488, %v493
    %497 = vrot.lane.b32.xlu0 %v495, 32
    %v498 = vpop.permute.xlu0 %497
    %v500 = vadd.f32 %v490, %v498
    %v501 = vtanh.pop %v500
    %503 = vrot.lane.b32.xlu0 %v501, 32
    %v504 = vpop.permute.xlu0 %503
    %v506 = vmul.f32 %v488, %v504
    %508 = vrot.lane.b32.xlu0 %v506, 64
    %v509 = vpop.permute.xlu0 %508
    %v510 = vsel %vm211, %v509, 0
    %512 = vmatprep.subr.mxu0 0.0
    %513 = vmatpush1.msra.mxu0 %v40
    %514 = vmatprep.subr.mxu0 0.0
    %515 = vmatpush1.msra.mxu0 %v41
    %516 = vmatprep.subr.mxu0 0.0
    %517 = vmatpush1.msra.mxu0 %v42
    %518 = vmatprep.subr.mxu0 0.0
    %519 = vmatpush1.msra.mxu0 %v43
    %520 = vmatprep.subr.mxu0 0.0
    %521 = vmatpush1.msra.mxu0 0.0
    %522 = vmatprep.subr.mxu0 0.0
    %523 = vmatpush1.msra.mxu0 0.0
    %524 = vmatprep.subr.mxu0 0.0
    %525 = vmatpush1.msra.mxu0 0.0
    %526 = vmatprep.subr.mxu0 0.0
    %527 = vmatpush1.msra.mxu0 0.0
    %528 = vmatprep.subr.mxu0 0.0
    %529 = vmatpush1.msra.mxu0 0.0
    %530 = vmatprep.subr.mxu0 0.0
    %531 = vmatpush1.msra.mxu0 0.0
    %532 = vmatprep.subr.mxu0 0.0
    %533 = vmatpush1.msra.mxu0 0.0
    %534 = vmatprep.subr.mxu0 0.0
    %535 = vmatpush1.msra.mxu0 0.0
    %536 = vmatprep.subr.mxu0 0.0
    %537 = vmatpush1.msra.mxu0 0.0
    %538 = vmatprep.subr.mxu0 0.0
    %539 = vmatpush1.msra.mxu0 0.0
    %540 = vmatprep.subr.mxu0 0.0
    %541 = vmatpush1.msra.mxu0 0.0
    %542 = vmatprep.subr.mxu0 0.0
    %543 = vmatpush1.msra.mxu0 0.0
    %544 = vmatprep.subr.mxu0 0.0
    %545 = vmatpush1.msra.mxu0 0.0
    %546 = vmatprep.subr.mxu0 0.0
    %547 = vmatpush1.msra.mxu0 0.0
    %548 = vmatprep.subr.mxu0 0.0
    %549 = vmatpush1.msra.mxu0 0.0
    %550 = vmatprep.subr.mxu0 0.0
    %551 = vmatpush1.msra.mxu0 0.0
    %552 = vmatprep.subr.mxu0 0.0
    %553 = vmatpush1.msra.mxu0 0.0
    %554 = vmatprep.subr.mxu0 0.0
    %555 = vmatpush1.msra.mxu0 0.0
    %556 = vmatprep.subr.mxu0 0.0
    %557 = vmatpush1.msra.mxu0 0.0
    %558 = vmatprep.subr.mxu0 0.0
    %559 = vmatpush1.msra.mxu0 0.0
    %560 = vmatprep.subr.mxu0 0.0
    %561 = vmatpush1.msra.mxu0 0.0
    %562 = vmatprep.subr.mxu0 0.0
    %563 = vmatpush1.msra.mxu0 0.0
    %564 = vmatprep.subr.mxu0 0.0
    %565 = vmatpush1.msra.mxu0 0.0
    %566 = vmatprep.subr.mxu0 0.0
    %567 = vmatpush1.msra.mxu0 0.0
    %568 = vmatprep.subr.mxu0 0.0
    %569 = vmatpush1.msra.mxu0 0.0
    %570 = vmatprep.subr.mxu0 0.0
    %571 = vmatpush1.msra.mxu0 0.0
    %572 = vmatprep.subr.mxu0 0.0
    %573 = vmatpush1.msra.mxu0 0.0
    %574 = vmatprep.subr.mxu0 0.0
    %575 = vmatpush1.msra.mxu0 0.0
    %576 = vmatprep.mubr.f32.mxu0 0.0
    %577 = vmatmul.mubr.f32.gmra.mrb[0].mxu0 %v510
    %v578 = vpop.f32.mrb[0].mxu0
    %v579 = vadd.f32 0.0, %v578
    %v580 = vpop.f32.mrb[0].mxu0
    %581 = vdwg.mxu0
    %v583 = vrot.slane %v579, 6
    %v585 = vadd.f32 %v400, %v583
    %v586 = vxor.u32 %v585, 2147483648
    %v587 = vmul.f32 %v586, 1.442695
    %v588 = vpow.pop %v587
    %v589 = vadd.f32 %v588, 1.0
    %v590 = vrcp.pop %v589
    %v591 = vmul.f32 1.0, %v590
    %v592 = vtanh.pop %v585
    %v594 = vrot.slane %v500, 6
    %v596 = vmul.f32 %v591, %v594
    %598 = vrot.lane.b32.xlu0 %v592, 32
    %v599 = vpop.permute.xlu0 %598
    %v601 = vmul.f32 %v591, %v599
    %603 = vrot.lane.b32.xlu0 %v601, 32
    %v604 = vpop.permute.xlu0 %603
    %v606 = vadd.f32 %v596, %v604
    %v607 = vtanh.pop %v606
    %609 = vrot.lane.b32.xlu0 %v607, 32
    %v610 = vpop.permute.xlu0 %609
    %v612 = vmul.f32 %v591, %v610
    %v614 = vrot.slane %v612, 2
    %615 = vrot.lane.b32.xlu0 %v614, 64
    %v616 = vpop.permute.xlu0 %615
    %v617 = vsel %vm211, %v616, 0
    %619 = vmatprep.subr.mxu0 0.0
    %620 = vmatpush1.msra.mxu0 %v40
    %621 = vmatprep.subr.mxu0 0.0
    %622 = vmatpush1.msra.mxu0 %v41
    %623 = vmatprep.subr.mxu0 0.0
    %624 = vmatpush1.msra.mxu0 %v42
    %625 = vmatprep.subr.mxu0 0.0
    %626 = vmatpush1.msra.mxu0 %v43
    %627 = vmatprep.subr.mxu0 0.0
    %628 = vmatpush1.msra.mxu0 0.0
    %629 = vmatprep.subr.mxu0 0.0
    %630 = vmatpush1.msra.mxu0 0.0
    %631 = vmatprep.subr.mxu0 0.0
    %632 = vmatpush1.msra.mxu0 0.0
    %633 = vmatprep.subr.mxu0 0.0
    %634 = vmatpush1.msra.mxu0 0.0
    %635 = vmatprep.subr.mxu0 0.0
    %636 = vmatpush1.msra.mxu0 0.0
    %637 = vmatprep.subr.mxu0 0.0
    %638 = vmatpush1.msra.mxu0 0.0
    %639 = vmatprep.subr.mxu0 0.0
    %640 = vmatpush1.msra.mxu0 0.0
    %641 = vmatprep.subr.mxu0 0.0
    %642 = vmatpush1.msra.mxu0 0.0
    %643 = vmatprep.subr.mxu0 0.0
    %644 = vmatpush1.msra.mxu0 0.0
    %645 = vmatprep.subr.mxu0 0.0
    %646 = vmatpush1.msra.mxu0 0.0
    %647 = vmatprep.subr.mxu0 0.0
    %648 = vmatpush1.msra.mxu0 0.0
    %649 = vmatprep.subr.mxu0 0.0
    %650 = vmatpush1.msra.mxu0 0.0
    %651 = vmatprep.subr.mxu0 0.0
    %652 = vmatpush1.msra.mxu0 0.0
    %653 = vmatprep.subr.mxu0 0.0
    %654 = vmatpush1.msra.mxu0 0.0
    %655 = vmatprep.subr.mxu0 0.0
    %656 = vmatpush1.msra.mxu0 0.0
    %657 = vmatprep.subr.mxu0 0.0
    %658 = vmatpush1.msra.mxu0 0.0
    %659 = vmatprep.subr.mxu0 0.0
    %660 = vmatpush1.msra.mxu0 0.0
    %661 = vmatprep.subr.mxu0 0.0
    %662 = vmatpush1.msra.mxu0 0.0
    %663 = vmatprep.subr.mxu0 0.0
    %664 = vmatpush1.msra.mxu0 0.0
    %665 = vmatprep.subr.mxu0 0.0
    %666 = vmatpush1.msra.mxu0 0.0
    %667 = vmatprep.subr.mxu0 0.0
    %668 = vmatpush1.msra.mxu0 0.0
    %669 = vmatprep.subr.mxu0 0.0
    %670 = vmatpush1.msra.mxu0 0.0
    %671 = vmatprep.subr.mxu0 0.0
    %672 = vmatpush1.msra.mxu0 0.0
    %673 = vmatprep.subr.mxu0 0.0
    %674 = vmatpush1.msra.mxu0 0.0
    %675 = vmatprep.subr.mxu0 0.0
    %676 = vmatpush1.msra.mxu0 0.0
    %677 = vmatprep.subr.mxu0 0.0
    %678 = vmatpush1.msra.mxu0 0.0
    %679 = vmatprep.subr.mxu0 0.0
    %680 = vmatpush1.msra.mxu0 0.0
    %681 = vmatprep.subr.mxu0 0.0
    %682 = vmatpush1.msra.mxu0 0.0
    %683 = vmatprep.mubr.f32.mxu0 0.0
    %684 = vmatmul.mubr.f32.gmra.mrb[0].mxu0 %v617
    %v685 = vpop.f32.mrb[0].mxu0
    %v686 = vadd.f32 0.0, %v685
    %v687 = vpop.f32.mrb[0].mxu0
    %688 = vdwg.mxu0
    %v690 = vrot.slane %v686, 4
    %v692 = vadd.f32 %v400, %v690
    %v693 = vxor.u32 %v692, 2147483648
    %v694 = vmul.f32 %v693, 1.442695
    %v695 = vpow.pop %v694
    %v696 = vadd.f32 %v695, 1.0
    %v697 = vrcp.pop %v696
    %v698 = vmul.f32 1.0, %v697
    %v699 = vtanh.pop %v692
    %v701 = vrot.slane %v606, 6
    %v703 = vmul.f32 %v698, %v701
    %705 = vrot.lane.b32.xlu0 %v699, 32
    %v706 = vpop.permute.xlu0 %705
    %v708 = vmul.f32 %v698, %v706
    %710 = vrot.lane.b32.xlu0 %v708, 32
    %v711 = vpop.permute.xlu0 %710
    %v713 = vadd.f32 %v703, %v711
    %v714 = vtanh.pop %v713
    %716 = vrot.lane.b32.xlu0 %v714, 32
    %v717 = vpop.permute.xlu0 %716
    %v719 = vmul.f32 %v698, %v717
    %v721 = vrot.slane %v719, 4
    %722 = vrot.lane.b32.xlu0 %v721, 64
    %v723 = vpop.permute.xlu0 %722
    %v724 = vsel %vm211, %v723, 0
    %726 = vmatprep.subr.mxu0 0.0
    %727 = vmatpush1.msra.mxu0 %v40
    %728 = vmatprep.subr.mxu0 0.0
    %729 = vmatpush1.msra.mxu0 %v41
    %730 = vmatprep.subr.mxu0 0.0
    %731 = vmatpush1.msra.mxu0 %v42
    %732 = vmatprep.subr.mxu0 0.0
    %733 = vmatpush1.msra.mxu0 %v43
    %734 = vmatprep.subr.mxu0 0.0
    %735 = vmatpush1.msra.mxu0 0.0
    %736 = vmatprep.subr.mxu0 0.0
    %737 = vmatpush1.msra.mxu0 0.0
    %738 = vmatprep.subr.mxu0 0.0
    %739 = vmatpush1.msra.mxu0 0.0
    %740 = vmatprep.subr.mxu0 0.0
    %741 = vmatpush1.msra.mxu0 0.0
    %742 = vmatprep.subr.mxu0 0.0
    %743 = vmatpush1.msra.mxu0 0.0
    %744 = vmatprep.subr.mxu0 0.0
    %745 = vmatpush1.msra.mxu0 0.0
    %746 = vmatprep.subr.mxu0 0.0
    %747 = vmatpush1.msra.mxu0 0.0
    %748 = vmatprep.subr.mxu0 0.0
    %749 = vmatpush1.msra.mxu0 0.0
    %750 = vmatprep.subr.mxu0 0.0
    %751 = vmatpush1.msra.mxu0 0.0
    %752 = vmatprep.subr.mxu0 0.0
    %753 = vmatpush1.msra.mxu0 0.0
    %754 = vmatprep.subr.mxu0 0.0
    %755 = vmatpush1.msra.mxu0 0.0
    %756 = vmatprep.subr.mxu0 0.0
    %757 = vmatpush1.msra.mxu0 0.0
    %758 = vmatprep.subr.mxu0 0.0
    %759 = vmatpush1.msra.mxu0 0.0
    %760 = vmatprep.subr.mxu0 0.0
    %761 = vmatpush1.msra.mxu0 0.0
    %762 = vmatprep.subr.mxu0 0.0
    %763 = vmatpush1.msra.mxu0 0.0
    %764 = vmatprep.subr.mxu0 0.0
    %765 = vmatpush1.msra.mxu0 0.0
    %766 = vmatprep.subr.mxu0 0.0
    %767 = vmatpush1.msra.mxu0 0.0
    %768 = vmatprep.subr.mxu0 0.0
    %769 = vmatpush1.msra.mxu0 0.0
    %770 = vmatprep.subr.mxu0 0.0
    %771 = vmatpush1.msra.mxu0 0.0
    %772 = vmatprep.subr.mxu0 0.0
    %773 = vmatpush1.msra.mxu0 0.0
    %774 = vmatprep.subr.mxu0 0.0
    %775 = vmatpush1.msra.mxu0 0.0
    %776 = vmatprep.subr.mxu0 0.0
    %777 = vmatpush1.msra.mxu0 0.0
    %778 = vmatprep.subr.mxu0 0.0
    %779 = vmatpush1.msra.mxu0 0.0
    %780 = vmatprep.subr.mxu0 0.0
    %781 = vmatpush1.msra.mxu0 0.0
    %782 = vmatprep.subr.mxu0 0.0
    %783 = vmatpush1.msra.mxu0 0.0
    %784 = vmatprep.subr.mxu0 0.0
    %785 = vmatpush1.msra.mxu0 0.0
    %786 = vmatprep.subr.mxu0 0.0
    %787 = vmatpush1.msra.mxu0 0.0
    %788 = vmatprep.subr.mxu0 0.0
    %789 = vmatpush1.msra.mxu0 0.0
    %790 = vmatprep.mubr.f32.mxu0 0.0
    %791 = vmatmul.mubr.f32.gmra.mrb[0].mxu0 %v724
    %v792 = vpop.f32.mrb[0].mxu0
    %v793 = vadd.f32 0.0, %v792
    %v794 = vpop.f32.mrb[0].mxu0
    %795 = vdwg.mxu0
    %v797 = vrot.slane %v793, 2
    %v799 = vadd.f32 %v400, %v797
    %v800 = vxor.u32 %v799, 2147483648
    %v801 = vmul.f32 %v800, 1.442695
    %v802 = vpow.pop %v801
    %v803 = vadd.f32 %v802, 1.0
    %v804 = vrcp.pop %v803
    %v805 = vmul.f32 1.0, %v804
    %v806 = vtanh.pop %v799
    %v808 = vrot.slane %v713, 6
    %v810 = vmul.f32 %v805, %v808
    %812 = vrot.lane.b32.xlu0 %v806, 32
    %v813 = vpop.permute.xlu0 %812
    %v815 = vmul.f32 %v805, %v813
    %817 = vrot.lane.b32.xlu0 %v815, 32
    %v818 = vpop.permute.xlu0 %817
    %v820 = vadd.f32 %v810, %v818
    %v821 = vtanh.pop %v820
    %823 = vrot.lane.b32.xlu0 %v821, 32
    %v824 = vpop.permute.xlu0 %823
    %v826 = vmul.f32 %v805, %v824
    %v828 = vrot.slane %v826, 6
    %829 = vrot.lane.b32.xlu0 %v828, 64
    %v830 = vpop.permute.xlu0 %829
    %v831 = vsel %vm211, %v830, 0
    %833 = vmatprep.subr.mxu0 0.0
    %834 = vmatpush1.msra.mxu0 %v40
    %835 = vmatprep.subr.mxu0 0.0
    %836 = vmatpush1.msra.mxu0 %v41
    %837 = vmatprep.subr.mxu0 0.0
    %838 = vmatpush1.msra.mxu0 %v42
    %839 = vmatprep.subr.mxu0 0.0
    %840 = vmatpush1.msra.mxu0 %v43
    %841 = vmatprep.subr.mxu0 0.0
    %842 = vmatpush1.msra.mxu0 0.0
    %843 = vmatprep.subr.mxu0 0.0
    %844 = vmatpush1.msra.mxu0 0.0
    %845 = vmatprep.subr.mxu0 0.0
    %846 = vmatpush1.msra.mxu0 0.0
    %847 = vmatprep.subr.mxu0 0.0
    %848 = vmatpush1.msra.mxu0 0.0
    %849 = vmatprep.subr.mxu0 0.0
    %850 = vmatpush1.msra.mxu0 0.0
    %851 = vmatprep.subr.mxu0 0.0
    %852 = vmatpush1.msra.mxu0 0.0
    %853 = vmatprep.subr.mxu0 0.0
    %854 = vmatpush1.msra.mxu0 0.0
    %855 = vmatprep.subr.mxu0 0.0
    %856 = vmatpush1.msra.mxu0 0.0
    %857 = vmatprep.subr.mxu0 0.0
    %858 = vmatpush1.msra.mxu0 0.0
    %859 = vmatprep.subr.mxu0 0.0
    %860 = vmatpush1.msra.mxu0 0.0
    %861 = vmatprep.subr.mxu0 0.0
    %862 = vmatpush1.msra.mxu0 0.0
    %863 = vmatprep.subr.mxu0 0.0
    %864 = vmatpush1.msra.mxu0 0.0
    %865 = vmatprep.subr.mxu0 0.0
    %866 = vmatpush1.msra.mxu0 0.0
    %867 = vmatprep.subr.mxu0 0.0
    %868 = vmatpush1.msra.mxu0 0.0
    %869 = vmatprep.subr.mxu0 0.0
    %870 = vmatpush1.msra.mxu0 0.0
    %871 = vmatprep.subr.mxu0 0.0
    %872 = vmatpush1.msra.mxu0 0.0
    %873 = vmatprep.subr.mxu0 0.0
    %874 = vmatpush1.msra.mxu0 0.0
    %875 = vmatprep.subr.mxu0 0.0
    %876 = vmatpush1.msra.mxu0 0.0
    %877 = vmatprep.subr.mxu0 0.0
    %878 = vmatpush1.msra.mxu0 0.0
    %879 = vmatprep.subr.mxu0 0.0
    %880 = vmatpush1.msra.mxu0 0.0
    %881 = vmatprep.subr.mxu0 0.0
    %882 = vmatpush1.msra.mxu0 0.0
    %883 = vmatprep.subr.mxu0 0.0
    %884 = vmatpush1.msra.mxu0 0.0
    %885 = vmatprep.subr.mxu0 0.0
    %886 = vmatpush1.msra.mxu0 0.0
    %887 = vmatprep.subr.mxu0 0.0
    %888 = vmatpush1.msra.mxu0 0.0
    %889 = vmatprep.subr.mxu0 0.0
    %890 = vmatpush1.msra.mxu0 0.0
    %891 = vmatprep.subr.mxu0 0.0
    %892 = vmatpush1.msra.mxu0 0.0
    %893 = vmatprep.subr.mxu0 0.0
    %894 = vmatpush1.msra.mxu0 0.0
    %895 = vmatprep.subr.mxu0 0.0
    %896 = vmatpush1.msra.mxu0 0.0
    %897 = vmatprep.mubr.f32.mxu0 0.0
    %898 = vmatmul.mubr.f32.gmra.mrb[0].mxu0 %v831
    %v899 = vpop.f32.mrb[0].mxu0
    %v900 = vadd.f32 0.0, %v899
    %v901 = vpop.f32.mrb[0].mxu0
    %902 = vdwg.mxu0
    %v903 = vadd.f32 %v405, %v900
    %v904 = vxor.u32 %v903, 2147483648
    %v905 = vmul.f32 %v904, 1.442695
    %v906 = vpow.pop %v905
    %v907 = vadd.f32 %v906, 1.0
    %v908 = vrcp.pop %v907
    %v909 = vmul.f32 1.0, %v908
    %v910 = vtanh.pop %v903
    %v912 = vrot.slane %v820, 6
    %v914 = vmul.f32 %v909, %v912
    %916 = vrot.lane.b32.xlu0 %v910, 32
    %v917 = vpop.permute.xlu0 %916
    %v919 = vmul.f32 %v909, %v917
    %921 = vrot.lane.b32.xlu0 %v919, 32
    %v922 = vpop.permute.xlu0 %921
    %v924 = vadd.f32 %v914, %v922
    %v925 = vtanh.pop %v924
    %927 = vrot.lane.b32.xlu0 %v925, 32
    %v928 = vpop.permute.xlu0 %927
    %v930 = vmul.f32 %v909, %v928
    %932 = vrot.lane.b32.xlu0 %v930, 64
    %v933 = vpop.permute.xlu0 %932
    %v934 = vsel %vm211, %v933, 0
    %936 = vmatprep.subr.mxu0 0.0
    %937 = vmatpush1.msra.mxu0 %v40
    %938 = vmatprep.subr.mxu0 0.0
    %939 = vmatpush1.msra.mxu0 %v41
    %940 = vmatprep.subr.mxu0 0.0
    %941 = vmatpush1.msra.mxu0 %v42
    %942 = vmatprep.subr.mxu0 0.0
    %943 = vmatpush1.msra.mxu0 %v43
    %944 = vmatprep.subr.mxu0 0.0
    %945 = vmatpush1.msra.mxu0 0.0
    %946 = vmatprep.subr.mxu0 0.0
    %947 = vmatpush1.msra.mxu0 0.0
    %948 = vmatprep.subr.mxu0 0.0
    %949 = vmatpush1.msra.mxu0 0.0
    %950 = vmatprep.subr.mxu0 0.0
    %951 = vmatpush1.msra.mxu0 0.0
    %952 = vmatprep.subr.mxu0 0.0
    %953 = vmatpush1.msra.mxu0 0.0
    %954 = vmatprep.subr.mxu0 0.0
    %955 = vmatpush1.msra.mxu0 0.0
    %956 = vmatprep.subr.mxu0 0.0
    %957 = vmatpush1.msra.mxu0 0.0
    %958 = vmatprep.subr.mxu0 0.0
    %959 = vmatpush1.msra.mxu0 0.0
    %960 = vmatprep.subr.mxu0 0.0
    %961 = vmatpush1.msra.mxu0 0.0
    %962 = vmatprep.subr.mxu0 0.0
    %963 = vmatpush1.msra.mxu0 0.0
    %964 = vmatprep.subr.mxu0 0.0
    %965 = vmatpush1.msra.mxu0 0.0
    %966 = vmatprep.subr.mxu0 0.0
    %967 = vmatpush1.msra.mxu0 0.0
    %968 = vmatprep.subr.mxu0 0.0
    %969 = vmatpush1.msra.mxu0 0.0
    %970 = vmatprep.subr.mxu0 0.0
    %971 = vmatpush1.msra.mxu0 0.0
    %972 = vmatprep.subr.mxu0 0.0
    %973 = vmatpush1.msra.mxu0 0.0
    %974 = vmatprep.subr.mxu0 0.0
    %975 = vmatpush1.msra.mxu0 0.0
    %976 = vmatprep.subr.mxu0 0.0
    %977 = vmatpush1.msra.mxu0 0.0
    %978 = vmatprep.subr.mxu0 0.0
    %979 = vmatpush1.msra.mxu0 0.0
    %980 = vmatprep.subr.mxu0 0.0
    %981 = vmatpush1.msra.mxu0 0.0
    %982 = vmatprep.subr.mxu0 0.0
    %983 = vmatpush1.msra.mxu0 0.0
    %984 = vmatprep.subr.mxu0 0.0
    %985 = vmatpush1.msra.mxu0 0.0
    %986 = vmatprep.subr.mxu0 0.0
    %987 = vmatpush1.msra.mxu0 0.0
    %988 = vmatprep.subr.mxu0 0.0
    %989 = vmatpush1.msra.mxu0 0.0
    %990 = vmatprep.subr.mxu0 0.0
    %991 = vmatpush1.msra.mxu0 0.0
    %992 = vmatprep.subr.mxu0 0.0
    %993 = vmatpush1.msra.mxu0 0.0
    %994 = vmatprep.subr.mxu0 0.0
    %995 = vmatpush1.msra.mxu0 0.0
    %996 = vmatprep.subr.mxu0 0.0
    %997 = vmatpush1.msra.mxu0 0.0
    %998 = vmatprep.subr.mxu0 0.0
    %999 = vmatpush1.msra.mxu0 0.0
    %1000 = vmatprep.mubr.f32.mxu0 0.0
    %1001 = vmatmul.mubr.f32.gmra.mrb[0].mxu0 %v934
    %v1002 = vpop.f32.mrb[0].mxu0
    %v1003 = vadd.f32 0.0, %v1002
    %v1004 = vpop.f32.mrb[0].mxu0
    %1005 = vdwg.mxu0
    %v1007 = vrot.slane %v1003, 6
    %v1009 = vadd.f32 %v405, %v1007
    %v1010 = vxor.u32 %v1009, 2147483648
    %v1011 = vmul.f32 %v1010, 1.442695
    %v1012 = vpow.pop %v1011
    %v1013 = vadd.f32 %v1012, 1.0
    %v1014 = vrcp.pop %v1013
    %v1015 = vmul.f32 1.0, %v1014
    %v1016 = vtanh.pop %v1009
    %v1018 = vrot.slane %v924, 6
    %v1020 = vmul.f32 %v1015, %v1018
    %1022 = vrot.lane.b32.xlu0 %v1016, 32
    %v1023 = vpop.permute.xlu0 %1022
    %v1025 = vmul.f32 %v1015, %v1023
    %1027 = vrot.lane.b32.xlu0 %v1025, 32
    %v1028 = vpop.permute.xlu0 %1027
    %v1030 = vadd.f32 %v1020, %v1028
    %v1031 = vtanh.pop %v1030
    %1033 = vrot.lane.b32.xlu0 %v1031, 32
    %v1034 = vpop.permute.xlu0 %1033
    %v1036 = vmul.f32 %v1015, %v1034
    %v1038 = vrot.slane %v1036, 2
    %1039 = vrot.lane.b32.xlu0 %v1038, 64
    %v1040 = vpop.permute.xlu0 %1039
    %v1041 = vsel %vm211, %v1040, 0
    %1043 = vmatprep.subr.mxu0 0.0
    %1044 = vmatpush1.msra.mxu0 %v40
    %1045 = vmatprep.subr.mxu0 0.0
    %1046 = vmatpush1.msra.mxu0 %v41
    %1047 = vmatprep.subr.mxu0 0.0
    %1048 = vmatpush1.msra.mxu0 %v42
    %1049 = vmatprep.subr.mxu0 0.0
    %1050 = vmatpush1.msra.mxu0 %v43
    %1051 = vmatprep.subr.mxu0 0.0
    %1052 = vmatpush1.msra.mxu0 0.0
    %1053 = vmatprep.subr.mxu0 0.0
    %1054 = vmatpush1.msra.mxu0 0.0
    %1055 = vmatprep.subr.mxu0 0.0
    %1056 = vmatpush1.msra.mxu0 0.0
    %1057 = vmatprep.subr.mxu0 0.0
    %1058 = vmatpush1.msra.mxu0 0.0
    %1059 = vmatprep.subr.mxu0 0.0
    %1060 = vmatpush1.msra.mxu0 0.0
    %1061 = vmatprep.subr.mxu0 0.0
    %1062 = vmatpush1.msra.mxu0 0.0
    %1063 = vmatprep.subr.mxu0 0.0
    %1064 = vmatpush1.msra.mxu0 0.0
    %1065 = vmatprep.subr.mxu0 0.0
    %1066 = vmatpush1.msra.mxu0 0.0
    %1067 = vmatprep.subr.mxu0 0.0
    %1068 = vmatpush1.msra.mxu0 0.0
    %1069 = vmatprep.subr.mxu0 0.0
    %1070 = vmatpush1.msra.mxu0 0.0
    %1071 = vmatprep.subr.mxu0 0.0
    %1072 = vmatpush1.msra.mxu0 0.0
    %1073 = vmatprep.subr.mxu0 0.0
    %1074 = vmatpush1.msra.mxu0 0.0
    %1075 = vmatprep.subr.mxu0 0.0
    %1076 = vmatpush1.msra.mxu0 0.0
    %1077 = vmatprep.subr.mxu0 0.0
    %1078 = vmatpush1.msra.mxu0 0.0
    %1079 = vmatprep.subr.mxu0 0.0
    %1080 = vmatpush1.msra.mxu0 0.0
    %1081 = vmatprep.subr.mxu0 0.0
    %1082 = vmatpush1.msra.mxu0 0.0
    %1083 = vmatprep.subr.mxu0 0.0
    %1084 = vmatpush1.msra.mxu0 0.0
    %1085 = vmatprep.subr.mxu0 0.0
    %1086 = vmatpush1.msra.mxu0 0.0
    %1087 = vmatprep.subr.mxu0 0.0
    %1088 = vmatpush1.msra.mxu0 0.0
    %1089 = vmatprep.subr.mxu0 0.0
    %1090 = vmatpush1.msra.mxu0 0.0
    %1091 = vmatprep.subr.mxu0 0.0
    %1092 = vmatpush1.msra.mxu0 0.0
    %1093 = vmatprep.subr.mxu0 0.0
    %1094 = vmatpush1.msra.mxu0 0.0
    %1095 = vmatprep.subr.mxu0 0.0
    %1096 = vmatpush1.msra.mxu0 0.0
    %1097 = vmatprep.subr.mxu0 0.0
    %1098 = vmatpush1.msra.mxu0 0.0
    %1099 = vmatprep.subr.mxu0 0.0
    %1100 = vmatpush1.msra.mxu0 0.0
    %1101 = vmatprep.subr.mxu0 0.0
    %1102 = vmatpush1.msra.mxu0 0.0
    %1103 = vmatprep.subr.mxu0 0.0
    %1104 = vmatpush1.msra.mxu0 0.0
    %1105 = vmatprep.subr.mxu0 0.0
    %1106 = vmatpush1.msra.mxu0 0.0
    %1107 = vmatprep.mubr.f32.mxu0 0.0
    %1108 = vmatmul.mubr.f32.gmra.mrb[0].mxu0 %v1041
    %v1109 = vpop.f32.mrb[0].mxu0
    %v1110 = vadd.f32 0.0, %v1109
    %v1111 = vpop.f32.mrb[0].mxu0
    %1112 = vdwg.mxu0
    %v1114 = vrot.slane %v1110, 4
    %v1116 = vadd.f32 %v405, %v1114
    %v1117 = vxor.u32 %v1116, 2147483648
    %v1118 = vmul.f32 %v1117, 1.442695
    %v1119 = vpow.pop %v1118
    %v1120 = vadd.f32 %v1119, 1.0
    %v1121 = vrcp.pop %v1120
    %v1122 = vmul.f32 1.0, %v1121
    %v1123 = vtanh.pop %v1116
    %v1125 = vrot.slane %v1030, 6
    %v1127 = vmul.f32 %v1122, %v1125
    %1129 = vrot.lane.b32.xlu0 %v1123, 32
    %v1130 = vpop.permute.xlu0 %1129
    %v1132 = vmul.f32 %v1122, %v1130
    %1134 = vrot.lane.b32.xlu0 %v1132, 32
    %v1135 = vpop.permute.xlu0 %1134
    %v1137 = vadd.f32 %v1127, %v1135
    %v1138 = vtanh.pop %v1137
    %1140 = vrot.lane.b32.xlu0 %v1138, 32
    %v1141 = vpop.permute.xlu0 %1140
    %v1143 = vmul.f32 %v1122, %v1141
    %v1145 = vrot.slane %v1143, 4
    %1146 = vrot.lane.b32.xlu0 %v1145, 64
    %v1147 = vpop.permute.xlu0 %1146
    %v1148 = vsel %vm211, %v1147, 0
    %1150 = vmatprep.subr.mxu0 0.0
    %1151 = vmatpush1.msra.mxu0 %v40
    %1152 = vmatprep.subr.mxu0 0.0
    %1153 = vmatpush1.msra.mxu0 %v41
    %1154 = vmatprep.subr.mxu0 0.0
    %1155 = vmatpush1.msra.mxu0 %v42
    %1156 = vmatprep.subr.mxu0 0.0
    %1157 = vmatpush1.msra.mxu0 %v43
    %1158 = vmatprep.subr.mxu0 0.0
    %1159 = vmatpush1.msra.mxu0 0.0
    %1160 = vmatprep.subr.mxu0 0.0
    %1161 = vmatpush1.msra.mxu0 0.0
    %1162 = vmatprep.subr.mxu0 0.0
    %1163 = vmatpush1.msra.mxu0 0.0
    %1164 = vmatprep.subr.mxu0 0.0
    %1165 = vmatpush1.msra.mxu0 0.0
    %1166 = vmatprep.subr.mxu0 0.0
    %1167 = vmatpush1.msra.mxu0 0.0
    %1168 = vmatprep.subr.mxu0 0.0
    %1169 = vmatpush1.msra.mxu0 0.0
    %1170 = vmatprep.subr.mxu0 0.0
    %1171 = vmatpush1.msra.mxu0 0.0
    %1172 = vmatprep.subr.mxu0 0.0
    %1173 = vmatpush1.msra.mxu0 0.0
    %1174 = vmatprep.subr.mxu0 0.0
    %1175 = vmatpush1.msra.mxu0 0.0
    %1176 = vmatprep.subr.mxu0 0.0
    %1177 = vmatpush1.msra.mxu0 0.0
    %1178 = vmatprep.subr.mxu0 0.0
    %1179 = vmatpush1.msra.mxu0 0.0
    %1180 = vmatprep.subr.mxu0 0.0
    %1181 = vmatpush1.msra.mxu0 0.0
    %1182 = vmatprep.subr.mxu0 0.0
    %1183 = vmatpush1.msra.mxu0 0.0
    %1184 = vmatprep.subr.mxu0 0.0
    %1185 = vmatpush1.msra.mxu0 0.0
    %1186 = vmatprep.subr.mxu0 0.0
    %1187 = vmatpush1.msra.mxu0 0.0
    %1188 = vmatprep.subr.mxu0 0.0
    %1189 = vmatpush1.msra.mxu0 0.0
    %1190 = vmatprep.subr.mxu0 0.0
    %1191 = vmatpush1.msra.mxu0 0.0
    %1192 = vmatprep.subr.mxu0 0.0
    %1193 = vmatpush1.msra.mxu0 0.0
    %1194 = vmatprep.subr.mxu0 0.0
    %1195 = vmatpush1.msra.mxu0 0.0
    %1196 = vmatprep.subr.mxu0 0.0
    %1197 = vmatpush1.msra.mxu0 0.0
    %1198 = vmatprep.subr.mxu0 0.0
    %1199 = vmatpush1.msra.mxu0 0.0
    %1200 = vmatprep.subr.mxu0 0.0
    %1201 = vmatpush1.msra.mxu0 0.0
    %1202 = vmatprep.subr.mxu0 0.0
    %1203 = vmatpush1.msra.mxu0 0.0
    %1204 = vmatprep.subr.mxu0 0.0
    %1205 = vmatpush1.msra.mxu0 0.0
    %1206 = vmatprep.subr.mxu0 0.0
    %1207 = vmatpush1.msra.mxu0 0.0
    %1208 = vmatprep.subr.mxu0 0.0
    %1209 = vmatpush1.msra.mxu0 0.0
    %1210 = vmatprep.subr.mxu0 0.0
    %1211 = vmatpush1.msra.mxu0 0.0
    %1212 = vmatprep.subr.mxu0 0.0
    %1213 = vmatpush1.msra.mxu0 0.0
    %1214 = vmatprep.mubr.f32.mxu0 0.0
    %1215 = vmatmul.mubr.f32.gmra.mrb[0].mxu0 %v1148
    %v1216 = vpop.f32.mrb[0].mxu0
    %v1217 = vadd.f32 0.0, %v1216
    %v1218 = vpop.f32.mrb[0].mxu0
    %1219 = vdwg.mxu0
    %v1221 = vrot.slane %v1217, 2
    %v1223 = vadd.f32 %v405, %v1221
    %v1224 = vxor.u32 %v1223, 2147483648
    %v1225 = vmul.f32 %v1224, 1.442695
    %v1226 = vpow.pop %v1225
    %v1227 = vadd.f32 %v1226, 1.0
    %v1228 = vrcp.pop %v1227
    %v1229 = vmul.f32 1.0, %v1228
    %v1230 = vtanh.pop %v1223
    %v1232 = vrot.slane %v1137, 6
    %v1234 = vmul.f32 %v1229, %v1232
    %1236 = vrot.lane.b32.xlu0 %v1230, 32
    %v1237 = vpop.permute.xlu0 %1236
    %v1239 = vmul.f32 %v1229, %v1237
    %1241 = vrot.lane.b32.xlu0 %v1239, 32
    %v1242 = vpop.permute.xlu0 %1241
    %v1244 = vadd.f32 %v1234, %v1242
    %v1245 = vtanh.pop %v1244
    %1247 = vrot.lane.b32.xlu0 %v1245, 32
    %v1248 = vpop.permute.xlu0 %1247
    %v1250 = vmul.f32 %v1229, %v1248
    %v1251 = vxor.u32 %v407, 2147483648
    %v1252 = vmul.f32 %v1251, 1.442695
    %v1253 = vpow.pop %v1252
    %v1254 = vadd.f32 %v1253, 1.0
    %v1255 = vrcp.pop %v1254
    %v1256 = vmul.f32 1.0, %v1255
    %v1257 = vtanh.pop %v407
    %v1258 = vmul.f32 %v1256, 0.0
    %1260 = vrot.lane.b32.xlu0 %v1257, 32
    %v1261 = vpop.permute.xlu0 %1260
    %v1263 = vmul.f32 %v1256, %v1261
    %1265 = vrot.lane.b32.xlu0 %v1263, 32
    %v1266 = vpop.permute.xlu0 %1265
    %v1268 = vadd.f32 %v1258, %v1266
    %v1269 = vtanh.pop %v1268
    %1271 = vrot.lane.b32.xlu0 %v1269, 32
    %v1272 = vpop.permute.xlu0 %1271
    %v1274 = vmul.f32 %v1256, %v1272
    %1276 = vrot.lane.b32.xlu0 %v1250, 64
    %v1277 = vpop.permute.xlu0 %1276
    %1280 = vrot.lane.b32.xlu0 %v1274, 96
    %v1281 = vpop.permute.xlu0 %1280
    %v1283 = vsel %vm211, %v1277, %v1281
    %v1284 = vlaneseq
    %v1285 = vshrl.u32 %v1284, 7
    %v1286 = vsub.s32 3, %v1285
    %v1287 = vrot.slane %v35, %v1286
    %v1289 = vrot.slane %v1283, 6
    %vm1290 = vcmask 523264
    %v1291 = vsel %vm1290, %v1289, 0
    %1293 = vmatprep.subr.mxu0 0.0
    %1294 = vmatpush1.msra.mxu0 %v44
    %1295 = vmatprep.subr.mxu0 0.0
    %1296 = vmatpush1.msra.mxu0 %v45
    %1297 = vmatprep.subr.mxu0 0.0
    %1298 = vmatpush1.msra.mxu0 %v46
    %1299 = vmatprep.subr.mxu0 0.0
    %1300 = vmatpush1.msra.mxu0 %v47
    %1301 = vmatprep.subr.mxu0 0.0
    %1302 = vmatpush1.msra.mxu0 %v48
    %1303 = vmatprep.subr.mxu0 0.0
    %1304 = vmatpush1.msra.mxu0 %v49
    %1305 = vmatprep.subr.mxu0 0.0
    %1306 = vmatpush1.msra.mxu0 %v50
    %1307 = vmatprep.subr.mxu0 0.0
    %1308 = vmatpush1.msra.mxu0 %v51
    %1309 = vmatprep.subr.mxu0 0.0
    %1310 = vmatpush1.msra.mxu0 0.0
    %1311 = vmatprep.subr.mxu0 0.0
    %1312 = vmatpush1.msra.mxu0 0.0
    %1313 = vmatprep.subr.mxu0 0.0
    %1314 = vmatpush1.msra.mxu0 0.0
    %1315 = vmatprep.subr.mxu0 0.0
    %1316 = vmatpush1.msra.mxu0 0.0
    %1317 = vmatprep.subr.mxu0 0.0
    %1318 = vmatpush1.msra.mxu0 0.0
    %1319 = vmatprep.subr.mxu0 0.0
    %1320 = vmatpush1.msra.mxu0 0.0
    %1321 = vmatprep.subr.mxu0 0.0
    %1322 = vmatpush1.msra.mxu0 0.0
    %1323 = vmatprep.subr.mxu0 0.0
    %1324 = vmatpush1.msra.mxu0 0.0
    %1325 = vmatprep.subr.mxu0 0.0
    %1326 = vmatpush1.msra.mxu0 0.0
    %1327 = vmatprep.subr.mxu0 0.0
    %1328 = vmatpush1.msra.mxu0 0.0
    %1329 = vmatprep.subr.mxu0 0.0
    %1330 = vmatpush1.msra.mxu0 0.0
    %1331 = vmatprep.subr.mxu0 0.0
    %1332 = vmatpush1.msra.mxu0 0.0
    %1333 = vmatprep.subr.mxu0 0.0
    %1334 = vmatpush1.msra.mxu0 0.0
    %1335 = vmatprep.subr.mxu0 0.0
    %1336 = vmatpush1.msra.mxu0 0.0
    %1337 = vmatprep.subr.mxu0 0.0
    %1338 = vmatpush1.msra.mxu0 0.0
    %1339 = vmatprep.subr.mxu0 0.0
    %1340 = vmatpush1.msra.mxu0 0.0
    %1341 = vmatprep.subr.mxu0 0.0
    %1342 = vmatpush1.msra.mxu0 0.0
    %1343 = vmatprep.subr.mxu0 0.0
    %1344 = vmatpush1.msra.mxu0 0.0
    %1345 = vmatprep.subr.mxu0 0.0
    %1346 = vmatpush1.msra.mxu0 0.0
    %1347 = vmatprep.subr.mxu0 0.0
    %1348 = vmatpush1.msra.mxu0 0.0
    %1349 = vmatprep.subr.mxu0 0.0
    %1350 = vmatpush1.msra.mxu0 0.0
    %1351 = vmatprep.subr.mxu0 0.0
    %1352 = vmatpush1.msra.mxu0 0.0
    %1353 = vmatprep.subr.mxu0 0.0
    %1354 = vmatpush1.msra.mxu0 0.0
    %1355 = vmatprep.subr.mxu0 0.0
    %1356 = vmatpush1.msra.mxu0 0.0
    %1357 = vmatprep.mubr.f32.mxu0 0.0
    %1358 = vmatmul.mubr.f32.gmra.mrb[0].mxu0 %v1291
    %v1359 = vpop.f32.mrb[0].mxu0
    %v1360 = vadd.f32 %v1287, %v1359
    %v1361 = vpop.f32.mrb[0].mxu0
    %1362 = vdwg.mxu0
    %vm1363 = vcmask 9216
    %1364 = vst.msk [vmem:[#allocation5] sm:$0x3] %vm1363, %v1360
    // Predicated region
    $region26: #{conv_lstm_forward.1} parent=1 // pred_check
      _
    $region27: #{conv_lstm_forward.1} parent=1 // pred_check_branch
      %1366 = sbr.rel (0) target = $region29
    $region28: #{conv_lstm_forward.1} parent=1 // pred_region
      %s1368 = ssub.s32 32, 32
      %1369 = vsyncadd [#allocation4], %s1368
      %s1371 = sshll.u32 [#allocation5], 4
      %s1372 = int_to_ptr.vmem [resolvable:$true] %s1371
      %1374 = dma.vmem_to_hbm [thread:$0]  %s1372, 32, %s5, [#allocation4]
    $region29: #{conv_lstm_forward.1} parent=1 // pred_fallthru
      _
    // Predicated region
    $region30: #{conv_lstm_forward.1} parent=1 // pred_check
      _
    $region31: #{conv_lstm_forward.1} parent=1 // pred_check_branch
      %1376 = sbr.rel (0) target = $region33
    $region32: #{conv_lstm_forward.1} parent=1 // pred_region
      %1377 = dma.done [#allocation4], 32
    $region33: #{conv_lstm_forward.1} parent=1 // pred_fallthru
      _
    %1378 = vsyncpa [#allocation3], 1
    %1379 = vsyncpa [#allocation4], 1

</llo_original>
